<compile_context>
chip_gen: v6e
topology: v6e:2x2x1
jax: 0.10.0
libtpu: 0.0.40
codegen_flags: <defaults>
</compile_context>

<pallas_src>
import functools

import jax
import jax.numpy as jnp
from jax.experimental import pallas as pl
from jax.experimental.pallas import tpu as pltpu


_LANE = 128
_SUBLANE = 8


def _round_up(x, m):
    return (x + m - 1) // m * m


def _chip_config():
    """Returns (num_batch_chunks, use_core_parallel) for the local TPU."""
    try:
        kind = jax.devices()[0].device_kind.lower()
    except Exception:  # pragma: no cover - defensive
        kind = ""
    # v7x has 2 TensorCores per chip: split the fused batch across them via
    # CORE_PARALLEL.  v5e / v6e are single-TC: one chunk (bigger MXU pushes,
    # one prologue matmul, no duplicated per-step overhead).
    if ("v7" in kind or "7x" in kind) and hasattr(pltpu, "CORE_PARALLEL"):
        return 2, True
    return 1, False


# ---------------------------------------------------------------------------
# Pallas kernel: fused LSTM recurrence + masked max-over-time for one batch
# chunk.  Inputs / weights / projected activations are VMEM resident; time is
# an in-kernel loop (capped unroll), not a grid axis.
# ---------------------------------------------------------------------------
def _lstm_max_kernel(x_ref, len_ref, wih_ref, whh_ref, b_ref, out_ref, xp_ref,
                     *, T, Bc, H):
    """
    x_ref   : (T, Bc, E)  bf16   time-major embedding slab (read in place)
    len_ref : (Bc, 1)     int32  per-row valid length (0 for padded rows)
    wih_ref : (E, G)      bf16   W_ih^T, gates packed contiguously (G >= 4H)
    whh_ref : (H, G)      bf16   W_hh^T, gates packed contiguously
    b_ref   : (1, G)      f32    fused b_ih + b_hh
    out_ref : (Bc, H)     f32    max over valid time steps of h_t
    xp_ref  : (T, Bc, G)  f32    scratch: hoisted input projection
    """
    E = x_ref.shape[-1]
    G = wih_ref.shape[-1]

    # ---- prologue: input projection hoisted out of the recurrence ----------
    # One (T*Bc, E) x (E, G) MXU matmul + one bias add, instead of T tiny
    # per-step matmuls.  Leading-dim reshapes are layout-free (Bc % 8 == 0).
    x2d = x_ref[...].reshape(T * Bc, E)
    xp_ref[...] = (jnp.dot(x2d, wih_ref[...], preferred_element_type=jnp.float32)
                   + b_ref[...]).reshape(T, Bc, G)

    # Hoisted loop invariants (JAX does not CSE broadcast_in_dim in the loop).
    len_b = jnp.broadcast_to(len_ref[...], (Bc, H)).astype(jnp.int32)
    whh = whh_ref[...]

    def step(t, carry):
        h, c, acc = carry                       # (Bc, H) f32, vreg/VMEM resident
        gates = xp_ref[t] + jnp.dot(h.astype(whh.dtype), whh,
                                    preferred_element_type=jnp.float32)  # (Bc, G)
        # One sigmoid + one tanh pass over the packed 4H-lane gate slab
        # (2 EUP passes/step instead of 4), then 32-lane gate sub-slices.
        sg = jax.nn.sigmoid(gates)
        th = jnp.tanh(gates)
        i_g = sg[:, 0 * H:1 * H]
        f_g = sg[:, 1 * H:2 * H]
        g_g = th[:, 2 * H:3 * H]
        o_g = sg[:, 3 * H:4 * H]
        c = f_g * c + i_g * g_g
        h = o_g * jnp.tanh(c)
        # pack/pad_packed semantics: steps with t >= length contribute 0.
        acc = jnp.maximum(acc, jnp.where(t < len_b, h, 0.0))
        return h, c, acc

    zeros = jnp.zeros((Bc, H), jnp.float32)
    init = (zeros, zeros, jnp.full((Bc, H), -jnp.inf, jnp.float32))
    _, _, acc = jax.lax.fori_loop(0, T, step, init, unroll=min(T, 8))
    out_ref[...] = acc


@functools.partial(jax.jit, static_argnames=("num_chunks", "core_parallel"))
def _lstm_max_fused(x, lens, wih_p, whh_p, bias_p, *, num_chunks, core_parallel):
    """x: (T, Bpad, E) bf16; lens: (Bpad, 1) i32 -> (Bpad, H) f32."""
    T, Bpad, E = x.shape
    Bc = Bpad // num_chunks
    H, G = whh_p.shape

    kernel = functools.partial(_lstm_max_kernel, T=T, Bc=Bc, H=H)

    # VMEM budget: x double-buffer + xp scratch + weights/bias + lens + out.
    vmem_bytes = (2 * T * Bc * E * 2            # x slab (bf16, double-buffered)
                  + T * Bc * G * 4              # xp scratch (f32)
                  + (E + H) * G * 2 + G * 4     # weights (bf16) + bias (f32)
                  + 2 * Bc * 4                  # lengths
                  + 2 * Bc * H * 4)             # output (f32, double-buffered)
    vmem_limit = int(min(max(2 * vmem_bytes + (8 << 20), 32 << 20), 128 << 20))

    if core_parallel:
        semantics = (pltpu.CORE_PARALLEL,)      # v7x: 2 TCs split the chunk axis
    else:
        semantics = ("arbitrary",)              # single-TC chips: plain loop

    grid_spec = pltpu.PrefetchScalarGridSpec(
        num_scalar_prefetch=0,
        grid=(num_chunks,),                                  # independent chunks
        in_specs=[
            pl.BlockSpec((T, Bc, E), lambda c: (0, c, 0)),   # in-place strided read
            pl.BlockSpec((Bc, 1), lambda c: (c, 0)),         # per-row lengths
            pl.BlockSpec((E, G), lambda c: (0, 0)),          # W_ih^T (resident)
            pl.BlockSpec((H, G), lambda c: (0, 0)),          # W_hh^T (resident)
            pl.BlockSpec((1, G), lambda c: (0, 0)),          # bias   (resident)
        ],
        out_specs=pl.BlockSpec((Bc, H), lambda c: (c, 0)),
        scratch_shapes=[pltpu.VMEM((T, Bc, G), jnp.float32)],  # hoisted x-projection
    )
    return pl.pallas_call(
        kernel,
        out_shape=jax.ShapeDtypeStruct((Bpad, H), jnp.float32),
        grid_spec=grid_spec,
        compiler_params=pltpu.CompilerParams(
            dimension_semantics=semantics,
            vmem_limit_bytes=vmem_limit),
    )(x, lens, wih_p, whh_p, bias_p)


# ---------------------------------------------------------------------------
# MyRNN forward (glue in plain JAX; hot path in the Pallas kernel above).
# ---------------------------------------------------------------------------
class MyRNNPallas:
    """JAX/Pallas port of MyRNN (1-layer unidirectional LSTM + max over time)."""

    def __init__(self, vocab_size, embedding_dim, hidden_size, key):
        self.vocab_size = vocab_size
        self.embedding_dim = embedding_dim
        self.hidden_size = hidden_size
        self.num_chunks, self.core_parallel = _chip_config()

        k_emb, k_ih, k_hh, k_bih, k_bhh = jax.random.split(key, 5)
        scale = 1.0 / jnp.sqrt(hidden_size)
        self.embeddings = jax.random.normal(
            k_emb, (vocab_size, embedding_dim), jnp.float32)
        # PyTorch LSTM parameter shapes: W_ih (4H,E), W_hh (4H,H), b_* (4H,).
        w_ih = jax.random.uniform(k_ih, (4 * hidden_size, embedding_dim),
                                  jnp.float32, -scale, scale)
        w_hh = jax.random.uniform(k_hh, (4 * hidden_size, hidden_size),
                                  jnp.float32, -scale, scale)
        b_ih = jax.random.uniform(k_bih, (4 * hidden_size,), jnp.float32, -scale, scale)
        b_hh = jax.random.uniform(k_bhh, (4 * hidden_size,), jnp.float32, -scale, scale)

        # Unpadded f32 parameters (x @ W^T form, fused bias) — reference source.
        self.w_ih_t = w_ih.T                          # (E, 4H)
        self.w_hh_t = w_hh.T                          # (H, 4H)
        self.bias = (b_ih + b_hh)[None, :]            # (1, 4H)

        # Kernel parameters: gates packed contiguously into 4*H lanes (padded
        # only at the end up to a lane multiple; zero padding for H=32),
        # bf16 matmul operands (f32 accumulate), f32 bias.
        H, E = hidden_size, embedding_dim
        G = _round_up(4 * H, _LANE)
        self.w_ih_p = (jnp.zeros((E, G), jnp.float32)
                       .at[:, :4 * H].set(self.w_ih_t).astype(jnp.bfloat16))
        self.w_hh_p = (jnp.zeros((H, G), jnp.float32)
                       .at[:, :4 * H].set(self.w_hh_t).astype(jnp.bfloat16))
        self.bias_p = jnp.zeros((1, G), jnp.float32).at[:, :4 * H].set(self.bias)

    def _encode_fused(self, tokens, lens_all):
        """tokens: (T, Btot) int32; lens_all: (Btot,) int32 -> (Btot, H) f32."""
        T, Btot = tokens.shape
        E = self.embedding_dim

        emb = jnp.take(self.embeddings, tokens.reshape(-1).astype(jnp.int32),
                       axis=0).reshape(T, Btot, E).astype(jnp.bfloat16)

        # Chip-dependent chunking of the fused batch (8-row aligned); no
        # host-side transpose — the kernel reads (T, Bc, E) slabs in place.
        C = self.num_chunks
        Bc = _round_up(-(-Btot // C), _SUBLANE)
        Bpad = C * Bc
        if Bpad != Btot:
            emb = jnp.pad(emb, ((0, 0), (0, Bpad - Btot), (0, 0)))
            lens_all = jnp.pad(lens_all, (0, Bpad - Btot))  # padded rows: length 0
        lens2d = lens_all.reshape(Bpad, 1).astype(jnp.int32)

        out = _lstm_max_fused(emb, lens2d, self.w_ih_p, self.w_hh_p, self.bias_p,
                              num_chunks=C, core_parallel=self.core_parallel)
        return out[:Btot]

    def forward(self, question, c_answers, n_answers, lengths, batch_size, isvalid):
        del batch_size  # hidden state is always zero-initialized inside the kernel
        seqs = [question, c_answers] if isvalid else [question, c_answers, n_answers]
        T, B = question.shape
        # The fused call requires a common sequence length across the encodes.
        # TODO(synk): pad to a common T if the encoders are ever fed different T.
        assert all(s.shape == (T, B) for s in seqs)

        full = jnp.full((B,), T, jnp.int32)
        lens_all = jnp.concatenate(
            [lengths.reshape(-1).astype(jnp.int32)] + [full] * (len(seqs) - 1))
        tokens = jnp.concatenate(seqs, axis=1)            # (T, S*B)

        out = self._encode_fused(tokens, lens_all)        # (S*B, H)
        return tuple(out[i * B:(i + 1) * B] for i in range(len(seqs)))


# ---------------------------------------------------------------------------
# Pure-JAX reference (mirrors the kernel's bf16-operand / f32-accumulate math).
# ---------------------------------------------------------------------------
def _ref_lstm_max(emb, lengths, w_ih_t, w_hh_t, bias, compute_dtype=jnp.bfloat16):
    T, B, _ = emb.shape
    H = w_hh_t.shape[0]
    x = emb.astype(compute_dtype)
    wih = w_ih_t.astype(compute_dtype)
    whh = w_hh_t.astype(compute_dtype)
    h = jnp.zeros((B, H), jnp.float32)
    c = jnp.zeros((B, H), jnp.float32)
    acc = jnp.full((B, H), -jnp.inf, jnp.float32)
    for t in range(T):
        g = (jnp.dot(x[t], wih, preferred_element_type=jnp.float32)
             + jnp.dot(h.astype(compute_dtype), whh,
                       preferred_element_type=jnp.float32) + bias)
        i = jax.nn.sigmoid(g[:, 0 * H:1 * H])
        f = jax.nn.sigmoid(g[:, 1 * H:2 * H])
        gg = jnp.tanh(g[:, 2 * H:3 * H])
        o = jax.nn.sigmoid(g[:, 3 * H:4 * H])
        c = f * c + i * gg
        h = o * jnp.tanh(c)
        acc = jnp.maximum(acc, jnp.where((t < lengths)[:, None], h, 0.0))
    return acc


if __name__ == "__main__":
    # Small shapes consistent with the module's forward.
    VOCAB, EMB, HID = 50, 32, 32
    T, B = 8, 8

    key = jax.random.PRNGKey(0)
    k_model, k_q, k_a, k_n = jax.random.split(key, 4)

    model = MyRNNPallas(VOCAB, EMB, HID, k_model)

    question = jax.random.randint(k_q, (T, B), 0, VOCAB, jnp.int32)
    c_answers = jax.random.randint(k_a, (T, B), 0, VOCAB, jnp.int32)
    n_answers = jax.random.randint(k_n, (T, B), 0, VOCAB, jnp.int32)
    # pack_padded_sequence requires lengths sorted in decreasing order.
    lengths = jnp.array([8, 8, 7, 6, 5, 4, 3, 2], jnp.int32)

    q_out, a_out, n_out = model.forward(
        question, c_answers, n_answers, lengths, B, isvalid=False)
    jax.block_until_ready((q_out, a_out, n_out))
    assert q_out.shape == (B, HID) and a_out.shape == (B, HID) and n_out.shape == (B, HID)

    # Cross-check the fused Pallas kernel against the pure-JAX reference.
    def embed(tok):
        return jnp.take(model.embeddings, tok.reshape(-1), axis=0).reshape(T, B, EMB)

    full = jnp.full((B,), T, jnp.int32)
    q_ref = _ref_lstm_max(embed(question), lengths,
                          model.w_ih_t, model.w_hh_t, model.bias)
    a_ref = _ref_lstm_max(embed(c_answers), full,
                          model.w_ih_t, model.w_hh_t, model.bias)
    n_ref = _ref_lstm_max(embed(n_answers), full,
                          model.w_ih_t, model.w_hh_t, model.bias)
    for got, ref in ((q_out, q_ref), (a_out, a_ref), (n_out, n_ref)):
        assert jnp.allclose(got, ref, atol=5e-3, rtol=5e-3), \
            float(jnp.max(jnp.abs(got - ref)))

    print("KERNEL_OK")
</pallas_src>

<mosaic_0001>
module attributes {stable_mosaic.version = 11 : i64} {
  func.func @_lstm_max_kernel(%arg0: i32, %arg1: memref<8x24x32xbf16, #tpu.memory_space<vmem>>, %arg2: memref<24x1xi32, #tpu.memory_space<vmem>>, %arg3: memref<32x128xbf16, #tpu.memory_space<vmem>>, %arg4: memref<32x128xbf16, #tpu.memory_space<vmem>>, %arg5: memref<1x128xf32, #tpu.memory_space<vmem>>, %arg6: memref<24x32xf32, #tpu.memory_space<vmem>>, %arg7: memref<8x24x128xf32, #tpu.memory_space<vmem>>) attributes {dimension_semantics = [#tpu.dimension_semantics<arbitrary>], iteration_bounds = array<i64: 1>, scalar_prefetch = 0 : i64, scratch_operands = 1 : i64, tpu.core_type = #tpu.core_type<tc>, window_params = [{transform_indices = @transform_0, window_bounds = array<i64: 8, 24, 32>}, {transform_indices = @transform_1, window_bounds = array<i64: 24, 1>}, {pipeline_mode = #tpu.pipeline_mode<synchronous>, transform_indices = @transform_2, window_bounds = array<i64: 32, 128>}, {pipeline_mode = #tpu.pipeline_mode<synchronous>, transform_indices = @transform_3, window_bounds = array<i64: 32, 128>}, {pipeline_mode = #tpu.pipeline_mode<synchronous>, transform_indices = @transform_4, window_bounds = array<i64: 1, 128>}, {transform_indices = @transform_5, window_bounds = array<i64: 24, 32>}]} {
    %c0 = arith.constant 0 : index
    %c0_0 = arith.constant 0 : index
    %c0_1 = arith.constant 0 : index
    %0 = vector.load %arg1[%c0, %c0_0, %c0_1] : memref<8x24x32xbf16, #tpu.memory_space<vmem>>, vector<8x24x32xbf16>
    %1 = vector.shape_cast %0 : vector<8x24x32xbf16> to vector<192x32xbf16>
    %c0_2 = arith.constant 0 : index
    %c0_3 = arith.constant 0 : index
    %2 = vector.load %arg3[%c0_2, %c0_3] : memref<32x128xbf16, #tpu.memory_space<vmem>>, vector<32x128xbf16>
    %cst = arith.constant dense<0.000000e+00> : vector<192x128xf32>
    %3 = tpu.matmul %1, %2, %cst {dimension_numbers = #tpu.dot_dimension_numbers<[1], [0], [0], [1], [0, 0, 1, 1], [], []>} : vector<192x32xbf16>, vector<32x128xbf16>, vector<192x128xf32> -> vector<192x128xf32>
    %c0_4 = arith.constant 0 : index
    %c0_5 = arith.constant 0 : index
    %4 = vector.load %arg5[%c0_4, %c0_5] : memref<1x128xf32, #tpu.memory_space<vmem>>, vector<1x128xf32>
    %5 = vector.broadcast %4 : vector<1x128xf32> to vector<192x128xf32>
    %6 = arith.addf %3, %5 : vector<192x128xf32>
    %7 = vector.shape_cast %6 : vector<192x128xf32> to vector<8x24x128xf32>
    %c0_6 = arith.constant 0 : index
    %c0_7 = arith.constant 0 : index
    %c0_8 = arith.constant 0 : index
    %8 = vector.load %arg7[%c0_6, %c0_7, %c0_8] : memref<8x24x128xf32, #tpu.memory_space<vmem>>, vector<8x24x128xf32>
    tpu.vector_store %arg7[%c0_6, %c0_7, %c0_8], %7 {strides = array<i32>} : memref<8x24x128xf32, #tpu.memory_space<vmem>>, vector<8x24x128xf32>,
    %c0_9 = arith.constant 0 : index
    %c0_10 = arith.constant 0 : index
    %9 = vector.load %arg2[%c0_9, %c0_10] : memref<24x1xi32, #tpu.memory_space<vmem>>, vector<24x1xi32>
    %10 = vector.shape_cast %9 : vector<24x1xi32> to vector<24x1xi32>
    %11 = vector.broadcast %10 : vector<24x1xi32> to vector<24x32xi32>
    %c0_11 = arith.constant 0 : index
    %c0_12 = arith.constant 0 : index
    %12 = vector.load %arg4[%c0_11, %c0_12] : memref<32x128xbf16, #tpu.memory_space<vmem>>, vector<32x128xbf16>
    %cst_13 = arith.constant 0.000000e+00 : f32
    %13 = vector.broadcast %cst_13 : f32 to vector<24x32xf32>
    %cst_14 = arith.constant 0xFF800000 : f32
    %14 = vector.broadcast %cst_14 : f32 to vector<24x32xf32>
    %c0_i32 = arith.constant 0 : i32
    %15 = arith.index_cast %c0_i32 : i32 to index
    %c0_15 = arith.constant 0 : index
    %c0_16 = arith.constant 0 : index
    %16 = vector.load %arg7[%15, %c0_15, %c0_16] : memref<8x24x128xf32, #tpu.memory_space<vmem>>, vector<1x24x128xf32>
    %17 = vector.shape_cast %16 : vector<1x24x128xf32> to vector<24x128xf32>
    %18 = arith.truncf %13 : vector<24x32xf32> to vector<24x32xbf16>
    %cst_17 = arith.constant dense<0.000000e+00> : vector<24x128xf32>
    %19 = tpu.matmul %18, %12, %cst_17 {dimension_numbers = #tpu.dot_dimension_numbers<[1], [0], [0], [1], [0, 0, 1, 1], [], []>} : vector<24x32xbf16>, vector<32x128xbf16>, vector<24x128xf32> -> vector<24x128xf32>
    %20 = arith.addf %17, %19 : vector<24x128xf32>
    %21 = arith.negf %20 : vector<24x128xf32>
    %22 = math.exp %21 : vector<24x128xf32>
    %cst_18 = arith.constant 1.000000e+00 : f32
    %23 = vector.broadcast %cst_18 : f32 to vector<24x128xf32>
    %24 = arith.addf %23, %22 : vector<24x128xf32>
    %25 = arith.divf %23, %24 : vector<24x128xf32>
    %26 = math.tanh %20 : vector<24x128xf32>
    %27 = vector.extract_strided_slice %25 {offsets = [0, 0], sizes = [24, 32], strides = [1, 1]} : vector<24x128xf32> to vector<24x32xf32>
    %28 = vector.extract_strided_slice %25 {offsets = [0, 32], sizes = [24, 32], strides = [1, 1]} : vector<24x128xf32> to vector<24x32xf32>
    %29 = vector.extract_strided_slice %26 {offsets = [0, 64], sizes = [24, 32], strides = [1, 1]} : vector<24x128xf32> to vector<24x32xf32>
    %30 = vector.extract_strided_slice %25 {offsets = [0, 96], sizes = [24, 32], strides = [1, 1]} : vector<24x128xf32> to vector<24x32xf32>
    %31 = arith.mulf %28, %13 : vector<24x32xf32>
    %32 = arith.mulf %27, %29 : vector<24x32xf32>
    %33 = arith.addf %31, %32 : vector<24x32xf32>
    %34 = math.tanh %33 : vector<24x32xf32>
    %35 = arith.mulf %30, %34 : vector<24x32xf32>
    %36 = vector.broadcast %c0_i32 : i32 to vector<24x32xi32>
    %37 = arith.cmpi slt, %36, %11 : vector<24x32xi32>
    %cst_19 = arith.constant 0.000000e+00 : f32
    %38 = vector.broadcast %cst_19 : f32 to vector<24x32xf32>
    %39 = arith.select %37, %35, %38 : vector<24x32xi1>, vector<24x32xf32>
    %40 = arith.maximumf %14, %39 : vector<24x32xf32>
    %c1_i32 = arith.constant 1 : i32
    %41 = arith.index_cast %c1_i32 : i32 to index
    %c0_20 = arith.constant 0 : index
    %c0_21 = arith.constant 0 : index
    %42 = vector.load %arg7[%41, %c0_20, %c0_21] : memref<8x24x128xf32, #tpu.memory_space<vmem>>, vector<1x24x128xf32>
    %43 = vector.shape_cast %42 : vector<1x24x128xf32> to vector<24x128xf32>
    %44 = arith.truncf %35 : vector<24x32xf32> to vector<24x32xbf16>
    %cst_22 = arith.constant dense<0.000000e+00> : vector<24x128xf32>
    %45 = tpu.matmul %44, %12, %cst_22 {dimension_numbers = #tpu.dot_dimension_numbers<[1], [0], [0], [1], [0, 0, 1, 1], [], []>} : vector<24x32xbf16>, vector<32x128xbf16>, vector<24x128xf32> -> vector<24x128xf32>
    %46 = arith.addf %43, %45 : vector<24x128xf32>
    %47 = arith.negf %46 : vector<24x128xf32>
    %48 = math.exp %47 : vector<24x128xf32>
    %cst_23 = arith.constant 1.000000e+00 : f32
    %49 = vector.broadcast %cst_23 : f32 to vector<24x128xf32>
    %50 = arith.addf %49, %48 : vector<24x128xf32>
    %51 = arith.divf %49, %50 : vector<24x128xf32>
    %52 = math.tanh %46 : vector<24x128xf32>
    %53 = vector.extract_strided_slice %51 {offsets = [0, 0], sizes = [24, 32], strides = [1, 1]} : vector<24x128xf32> to vector<24x32xf32>
    %54 = vector.extract_strided_slice %51 {offsets = [0, 32], sizes = [24, 32], strides = [1, 1]} : vector<24x128xf32> to vector<24x32xf32>
    %55 = vector.extract_strided_slice %52 {offsets = [0, 64], sizes = [24, 32], strides = [1, 1]} : vector<24x128xf32> to vector<24x32xf32>
    %56 = vector.extract_strided_slice %51 {offsets = [0, 96], sizes = [24, 32], strides = [1, 1]} : vector<24x128xf32> to vector<24x32xf32>
    %57 = arith.mulf %54, %33 : vector<24x32xf32>
    %58 = arith.mulf %53, %55 : vector<24x32xf32>
    %59 = arith.addf %57, %58 : vector<24x32xf32>
    %60 = math.tanh %59 : vector<24x32xf32>
    %61 = arith.mulf %56, %60 : vector<24x32xf32>
    %62 = vector.broadcast %c1_i32 : i32 to vector<24x32xi32>
    %63 = arith.cmpi slt, %62, %11 : vector<24x32xi32>
    %cst_24 = arith.constant 0.000000e+00 : f32
    %64 = vector.broadcast %cst_24 : f32 to vector<24x32xf32>
    %65 = arith.select %63, %61, %64 : vector<24x32xi1>, vector<24x32xf32>
    %66 = arith.maximumf %40, %65 : vector<24x32xf32>
    %c2_i32 = arith.constant 2 : i32
    %67 = arith.index_cast %c2_i32 : i32 to index
    %c0_25 = arith.constant 0 : index
    %c0_26 = arith.constant 0 : index
    %68 = vector.load %arg7[%67, %c0_25, %c0_26] : memref<8x24x128xf32, #tpu.memory_space<vmem>>, vector<1x24x128xf32>
    %69 = vector.shape_cast %68 : vector<1x24x128xf32> to vector<24x128xf32>
    %70 = arith.truncf %61 : vector<24x32xf32> to vector<24x32xbf16>
    %cst_27 = arith.constant dense<0.000000e+00> : vector<24x128xf32>
    %71 = tpu.matmul %70, %12, %cst_27 {dimension_numbers = #tpu.dot_dimension_numbers<[1], [0], [0], [1], [0, 0, 1, 1], [], []>} : vector<24x32xbf16>, vector<32x128xbf16>, vector<24x128xf32> -> vector<24x128xf32>
    %72 = arith.addf %69, %71 : vector<24x128xf32>
    %73 = arith.negf %72 : vector<24x128xf32>
    %74 = math.exp %73 : vector<24x128xf32>
    %cst_28 = arith.constant 1.000000e+00 : f32
    %75 = vector.broadcast %cst_28 : f32 to vector<24x128xf32>
    %76 = arith.addf %75, %74 : vector<24x128xf32>
    %77 = arith.divf %75, %76 : vector<24x128xf32>
    %78 = math.tanh %72 : vector<24x128xf32>
    %79 = vector.extract_strided_slice %77 {offsets = [0, 0], sizes = [24, 32], strides = [1, 1]} : vector<24x128xf32> to vector<24x32xf32>
    %80 = vector.extract_strided_slice %77 {offsets = [0, 32], sizes = [24, 32], strides = [1, 1]} : vector<24x128xf32> to vector<24x32xf32>
    %81 = vector.extract_strided_slice %78 {offsets = [0, 64], sizes = [24, 32], strides = [1, 1]} : vector<24x128xf32> to vector<24x32xf32>
    %82 = vector.extract_strided_slice %77 {offsets = [0, 96], sizes = [24, 32], strides = [1, 1]} : vector<24x128xf32> to vector<24x32xf32>
    %83 = arith.mulf %80, %59 : vector<24x32xf32>
    %84 = arith.mulf %79, %81 : vector<24x32xf32>
    %85 = arith.addf %83, %84 : vector<24x32xf32>
    %86 = math.tanh %85 : vector<24x32xf32>
    %87 = arith.mulf %82, %86 : vector<24x32xf32>
    %88 = vector.broadcast %c2_i32 : i32 to vector<24x32xi32>
    %89 = arith.cmpi slt, %88, %11 : vector<24x32xi32>
    %cst_29 = arith.constant 0.000000e+00 : f32
    %90 = vector.broadcast %cst_29 : f32 to vector<24x32xf32>
    %91 = arith.select %89, %87, %90 : vector<24x32xi1>, vector<24x32xf32>
    %92 = arith.maximumf %66, %91 : vector<24x32xf32>
    %c3_i32 = arith.constant 3 : i32
    %93 = arith.index_cast %c3_i32 : i32 to index
    %c0_30 = arith.constant 0 : index
    %c0_31 = arith.constant 0 : index
    %94 = vector.load %arg7[%93, %c0_30, %c0_31] : memref<8x24x128xf32, #tpu.memory_space<vmem>>, vector<1x24x128xf32>
    %95 = vector.shape_cast %94 : vector<1x24x128xf32> to vector<24x128xf32>
    %96 = arith.truncf %87 : vector<24x32xf32> to vector<24x32xbf16>
    %cst_32 = arith.constant dense<0.000000e+00> : vector<24x128xf32>
    %97 = tpu.matmul %96, %12, %cst_32 {dimension_numbers = #tpu.dot_dimension_numbers<[1], [0], [0], [1], [0, 0, 1, 1], [], []>} : vector<24x32xbf16>, vector<32x128xbf16>, vector<24x128xf32> -> vector<24x128xf32>
    %98 = arith.addf %95, %97 : vector<24x128xf32>
    %99 = arith.negf %98 : vector<24x128xf32>
    %100 = math.exp %99 : vector<24x128xf32>
    %cst_33 = arith.constant 1.000000e+00 : f32
    %101 = vector.broadcast %cst_33 : f32 to vector<24x128xf32>
    %102 = arith.addf %101, %100 : vector<24x128xf32>
    %103 = arith.divf %101, %102 : vector<24x128xf32>
    %104 = math.tanh %98 : vector<24x128xf32>
    %105 = vector.extract_strided_slice %103 {offsets = [0, 0], sizes = [24, 32], strides = [1, 1]} : vector<24x128xf32> to vector<24x32xf32>
    %106 = vector.extract_strided_slice %103 {offsets = [0, 32], sizes = [24, 32], strides = [1, 1]} : vector<24x128xf32> to vector<24x32xf32>
    %107 = vector.extract_strided_slice %104 {offsets = [0, 64], sizes = [24, 32], strides = [1, 1]} : vector<24x128xf32> to vector<24x32xf32>
    %108 = vector.extract_strided_slice %103 {offsets = [0, 96], sizes = [24, 32], strides = [1, 1]} : vector<24x128xf32> to vector<24x32xf32>
    %109 = arith.mulf %106, %85 : vector<24x32xf32>
    %110 = arith.mulf %105, %107 : vector<24x32xf32>
    %111 = arith.addf %109, %110 : vector<24x32xf32>
    %112 = math.tanh %111 : vector<24x32xf32>
    %113 = arith.mulf %108, %112 : vector<24x32xf32>
    %114 = vector.broadcast %c3_i32 : i32 to vector<24x32xi32>
    %115 = arith.cmpi slt, %114, %11 : vector<24x32xi32>
    %cst_34 = arith.constant 0.000000e+00 : f32
    %116 = vector.broadcast %cst_34 : f32 to vector<24x32xf32>
    %117 = arith.select %115, %113, %116 : vector<24x32xi1>, vector<24x32xf32>
    %118 = arith.maximumf %92, %117 : vector<24x32xf32>
    %c4_i32 = arith.constant 4 : i32
    %119 = arith.index_cast %c4_i32 : i32 to index
    %c0_35 = arith.constant 0 : index
    %c0_36 = arith.constant 0 : index
    %120 = vector.load %arg7[%119, %c0_35, %c0_36] : memref<8x24x128xf32, #tpu.memory_space<vmem>>, vector<1x24x128xf32>
    %121 = vector.shape_cast %120 : vector<1x24x128xf32> to vector<24x128xf32>
    %122 = arith.truncf %113 : vector<24x32xf32> to vector<24x32xbf16>
    %cst_37 = arith.constant dense<0.000000e+00> : vector<24x128xf32>
    %123 = tpu.matmul %122, %12, %cst_37 {dimension_numbers = #tpu.dot_dimension_numbers<[1], [0], [0], [1], [0, 0, 1, 1], [], []>} : vector<24x32xbf16>, vector<32x128xbf16>, vector<24x128xf32> -> vector<24x128xf32>
    %124 = arith.addf %121, %123 : vector<24x128xf32>
    %125 = arith.negf %124 : vector<24x128xf32>
    %126 = math.exp %125 : vector<24x128xf32>
    %cst_38 = arith.constant 1.000000e+00 : f32
    %127 = vector.broadcast %cst_38 : f32 to vector<24x128xf32>
    %128 = arith.addf %127, %126 : vector<24x128xf32>
    %129 = arith.divf %127, %128 : vector<24x128xf32>
    %130 = math.tanh %124 : vector<24x128xf32>
    %131 = vector.extract_strided_slice %129 {offsets = [0, 0], sizes = [24, 32], strides = [1, 1]} : vector<24x128xf32> to vector<24x32xf32>
    %132 = vector.extract_strided_slice %129 {offsets = [0, 32], sizes = [24, 32], strides = [1, 1]} : vector<24x128xf32> to vector<24x32xf32>
    %133 = vector.extract_strided_slice %130 {offsets = [0, 64], sizes = [24, 32], strides = [1, 1]} : vector<24x128xf32> to vector<24x32xf32>
    %134 = vector.extract_strided_slice %129 {offsets = [0, 96], sizes = [24, 32], strides = [1, 1]} : vector<24x128xf32> to vector<24x32xf32>
    %135 = arith.mulf %132, %111 : vector<24x32xf32>
    %136 = arith.mulf %131, %133 : vector<24x32xf32>
    %137 = arith.addf %135, %136 : vector<24x32xf32>
    %138 = math.tanh %137 : vector<24x32xf32>
    %139 = arith.mulf %134, %138 : vector<24x32xf32>
    %140 = vector.broadcast %c4_i32 : i32 to vector<24x32xi32>
    %141 = arith.cmpi slt, %140, %11 : vector<24x32xi32>
    %cst_39 = arith.constant 0.000000e+00 : f32
    %142 = vector.broadcast %cst_39 : f32 to vector<24x32xf32>
    %143 = arith.select %141, %139, %142 : vector<24x32xi1>, vector<24x32xf32>
    %144 = arith.maximumf %118, %143 : vector<24x32xf32>
    %c5_i32 = arith.constant 5 : i32
    %145 = arith.index_cast %c5_i32 : i32 to index
    %c0_40 = arith.constant 0 : index
    %c0_41 = arith.constant 0 : index
    %146 = vector.load %arg7[%145, %c0_40, %c0_41] : memref<8x24x128xf32, #tpu.memory_space<vmem>>, vector<1x24x128xf32>
    %147 = vector.shape_cast %146 : vector<1x24x128xf32> to vector<24x128xf32>
    %148 = arith.truncf %139 : vector<24x32xf32> to vector<24x32xbf16>
    %cst_42 = arith.constant dense<0.000000e+00> : vector<24x128xf32>
    %149 = tpu.matmul %148, %12, %cst_42 {dimension_numbers = #tpu.dot_dimension_numbers<[1], [0], [0], [1], [0, 0, 1, 1], [], []>} : vector<24x32xbf16>, vector<32x128xbf16>, vector<24x128xf32> -> vector<24x128xf32>
    %150 = arith.addf %147, %149 : vector<24x128xf32>
    %151 = arith.negf %150 : vector<24x128xf32>
    %152 = math.exp %151 : vector<24x128xf32>
    %cst_43 = arith.constant 1.000000e+00 : f32
    %153 = vector.broadcast %cst_43 : f32 to vector<24x128xf32>
    %154 = arith.addf %153, %152 : vector<24x128xf32>
    %155 = arith.divf %153, %154 : vector<24x128xf32>
    %156 = math.tanh %150 : vector<24x128xf32>
    %157 = vector.extract_strided_slice %155 {offsets = [0, 0], sizes = [24, 32], strides = [1, 1]} : vector<24x128xf32> to vector<24x32xf32>
    %158 = vector.extract_strided_slice %155 {offsets = [0, 32], sizes = [24, 32], strides = [1, 1]} : vector<24x128xf32> to vector<24x32xf32>
    %159 = vector.extract_strided_slice %156 {offsets = [0, 64], sizes = [24, 32], strides = [1, 1]} : vector<24x128xf32> to vector<24x32xf32>
    %160 = vector.extract_strided_slice %155 {offsets = [0, 96], sizes = [24, 32], strides = [1, 1]} : vector<24x128xf32> to vector<24x32xf32>
    %161 = arith.mulf %158, %137 : vector<24x32xf32>
    %162 = arith.mulf %157, %159 : vector<24x32xf32>
    %163 = arith.addf %161, %162 : vector<24x32xf32>
    %164 = math.tanh %163 : vector<24x32xf32>
    %165 = arith.mulf %160, %164 : vector<24x32xf32>
    %166 = vector.broadcast %c5_i32 : i32 to vector<24x32xi32>
    %167 = arith.cmpi slt, %166, %11 : vector<24x32xi32>
    %cst_44 = arith.constant 0.000000e+00 : f32
    %168 = vector.broadcast %cst_44 : f32 to vector<24x32xf32>
    %169 = arith.select %167, %165, %168 : vector<24x32xi1>, vector<24x32xf32>
    %170 = arith.maximumf %144, %169 : vector<24x32xf32>
    %c6_i32 = arith.constant 6 : i32
    %171 = arith.index_cast %c6_i32 : i32 to index
    %c0_45 = arith.constant 0 : index
    %c0_46 = arith.constant 0 : index
    %172 = vector.load %arg7[%171, %c0_45, %c0_46] : memref<8x24x128xf32, #tpu.memory_space<vmem>>, vector<1x24x128xf32>
    %173 = vector.shape_cast %172 : vector<1x24x128xf32> to vector<24x128xf32>
    %174 = arith.truncf %165 : vector<24x32xf32> to vector<24x32xbf16>
    %cst_47 = arith.constant dense<0.000000e+00> : vector<24x128xf32>
    %175 = tpu.matmul %174, %12, %cst_47 {dimension_numbers = #tpu.dot_dimension_numbers<[1], [0], [0], [1], [0, 0, 1, 1], [], []>} : vector<24x32xbf16>, vector<32x128xbf16>, vector<24x128xf32> -> vector<24x128xf32>
    %176 = arith.addf %173, %175 : vector<24x128xf32>
    %177 = arith.negf %176 : vector<24x128xf32>
    %178 = math.exp %177 : vector<24x128xf32>
    %cst_48 = arith.constant 1.000000e+00 : f32
    %179 = vector.broadcast %cst_48 : f32 to vector<24x128xf32>
    %180 = arith.addf %179, %178 : vector<24x128xf32>
    %181 = arith.divf %179, %180 : vector<24x128xf32>
    %182 = math.tanh %176 : vector<24x128xf32>
    %183 = vector.extract_strided_slice %181 {offsets = [0, 0], sizes = [24, 32], strides = [1, 1]} : vector<24x128xf32> to vector<24x32xf32>
    %184 = vector.extract_strided_slice %181 {offsets = [0, 32], sizes = [24, 32], strides = [1, 1]} : vector<24x128xf32> to vector<24x32xf32>
    %185 = vector.extract_strided_slice %182 {offsets = [0, 64], sizes = [24, 32], strides = [1, 1]} : vector<24x128xf32> to vector<24x32xf32>
    %186 = vector.extract_strided_slice %181 {offsets = [0, 96], sizes = [24, 32], strides = [1, 1]} : vector<24x128xf32> to vector<24x32xf32>
    %187 = arith.mulf %184, %163 : vector<24x32xf32>
    %188 = arith.mulf %183, %185 : vector<24x32xf32>
    %189 = arith.addf %187, %188 : vector<24x32xf32>
    %190 = math.tanh %189 : vector<24x32xf32>
    %191 = arith.mulf %186, %190 : vector<24x32xf32>
    %192 = vector.broadcast %c6_i32 : i32 to vector<24x32xi32>
    %193 = arith.cmpi slt, %192, %11 : vector<24x32xi32>
    %cst_49 = arith.constant 0.000000e+00 : f32
    %194 = vector.broadcast %cst_49 : f32 to vector<24x32xf32>
    %195 = arith.select %193, %191, %194 : vector<24x32xi1>, vector<24x32xf32>
    %196 = arith.maximumf %170, %195 : vector<24x32xf32>
    %c7_i32 = arith.constant 7 : i32
    %197 = arith.index_cast %c7_i32 : i32 to index
    %c0_50 = arith.constant 0 : index
    %c0_51 = arith.constant 0 : index
    %198 = vector.load %arg7[%197, %c0_50, %c0_51] : memref<8x24x128xf32, #tpu.memory_space<vmem>>, vector<1x24x128xf32>
    %199 = vector.shape_cast %198 : vector<1x24x128xf32> to vector<24x128xf32>
    %200 = arith.truncf %191 : vector<24x32xf32> to vector<24x32xbf16>
    %cst_52 = arith.constant dense<0.000000e+00> : vector<24x128xf32>
    %201 = tpu.matmul %200, %12, %cst_52 {dimension_numbers = #tpu.dot_dimension_numbers<[1], [0], [0], [1], [0, 0, 1, 1], [], []>} : vector<24x32xbf16>, vector<32x128xbf16>, vector<24x128xf32> -> vector<24x128xf32>
    %202 = arith.addf %199, %201 : vector<24x128xf32>
    %203 = arith.negf %202 : vector<24x128xf32>
    %204 = math.exp %203 : vector<24x128xf32>
    %cst_53 = arith.constant 1.000000e+00 : f32
    %205 = vector.broadcast %cst_53 : f32 to vector<24x128xf32>
    %206 = arith.addf %205, %204 : vector<24x128xf32>
    %207 = arith.divf %205, %206 : vector<24x128xf32>
    %208 = math.tanh %202 : vector<24x128xf32>
    %209 = vector.extract_strided_slice %207 {offsets = [0, 0], sizes = [24, 32], strides = [1, 1]} : vector<24x128xf32> to vector<24x32xf32>
    %210 = vector.extract_strided_slice %207 {offsets = [0, 32], sizes = [24, 32], strides = [1, 1]} : vector<24x128xf32> to vector<24x32xf32>
    %211 = vector.extract_strided_slice %208 {offsets = [0, 64], sizes = [24, 32], strides = [1, 1]} : vector<24x128xf32> to vector<24x32xf32>
    %212 = vector.extract_strided_slice %207 {offsets = [0, 96], sizes = [24, 32], strides = [1, 1]} : vector<24x128xf32> to vector<24x32xf32>
    %213 = arith.mulf %210, %189 : vector<24x32xf32>
    %214 = arith.mulf %209, %211 : vector<24x32xf32>
    %215 = arith.addf %213, %214 : vector<24x32xf32>
    %216 = math.tanh %215 : vector<24x32xf32>
    %217 = arith.mulf %212, %216 : vector<24x32xf32>
    %218 = vector.broadcast %c7_i32 : i32 to vector<24x32xi32>
    %219 = arith.cmpi slt, %218, %11 : vector<24x32xi32>
    %cst_54 = arith.constant 0.000000e+00 : f32
    %220 = vector.broadcast %cst_54 : f32 to vector<24x32xf32>
    %221 = arith.select %219, %217, %220 : vector<24x32xi1>, vector<24x32xf32>
    %222 = arith.maximumf %196, %221 : vector<24x32xf32>
    %c8_i32 = arith.constant 8 : i32
    %c0_55 = arith.constant 0 : index
    %c0_56 = arith.constant 0 : index
    %223 = vector.load %arg6[%c0_55, %c0_56] : memref<24x32xf32, #tpu.memory_space<vmem>>, vector<24x32xf32>
    tpu.vector_store %arg6[%c0_55, %c0_56], %222 {strides = array<i32>} : memref<24x32xf32, #tpu.memory_space<vmem>>, vector<24x32xf32>,
    return
  }
  func.func @transform_0(%arg0: i32) -> (i32, i32, i32) {
    %c0_i32 = arith.constant 0 : i32
    %c0_i32_0 = arith.constant 0 : i32
    %c0_i32_1 = arith.constant 0 : i32
    return %c0_i32, %arg0, %c0_i32_0 : i32, i32, i32
  }
  func.func @transform_1(%arg0: i32) -> (i32, i32) {
    %c0_i32 = arith.constant 0 : i32
    %c0_i32_0 = arith.constant 0 : i32
    return %arg0, %c0_i32 : i32, i32
  }
  func.func @transform_2(%arg0: i32) -> (i32, i32) {
    %c0_i32 = arith.constant 0 : i32
    %c0_i32_0 = arith.constant 0 : i32
    %c0_i32_1 = arith.constant 0 : i32
    return %c0_i32, %c0_i32_0 : i32, i32
  }
  func.func @transform_3(%arg0: i32) -> (i32, i32) {
    %c0_i32 = arith.constant 0 : i32
    %c0_i32_0 = arith.constant 0 : i32
    %c0_i32_1 = arith.constant 0 : i32
    return %c0_i32, %c0_i32_0 : i32, i32
  }
  func.func @transform_4(%arg0: i32) -> (i32, i32) {
    %c0_i32 = arith.constant 0 : i32
    %c0_i32_0 = arith.constant 0 : i32
    %c0_i32_1 = arith.constant 0 : i32
    return %c0_i32, %c0_i32_0 : i32, i32
  }
  func.func @transform_5(%arg0: i32) -> (i32, i32) {
    %c0_i32 = arith.constant 0 : i32
    %c0_i32_0 = arith.constant 0 : i32
    return %arg0, %c0_i32 : i32, i32
  }
}

</mosaic_0001>

<llo_original>
// kernel: _lstm_max_fused.1
$region0: #{_lstm_max_fused.1}
  #allocation0 [shape = 'u32[]', space=smem, size = 0x4, offset = 0x4, fixed_abs, tag = 'smem constant byte address 0x4 - core index']
  #allocation1 [shape = 'u32[144,128]{1,0:T(1,128)}', space=vmem, size = 0x12000, scoped, tag = 'internal scratch']
  #allocation2 [shape = 'f32[8,24,128]{2,1,0:T(8,128)}', space=vmem, size = 0x18000, scoped, tag = 'scratch operand']
  %s0 = inlined_call_operand.hbm [shape: bf16[8,24,32], index: 0, kind: input, shape index: {}]
  %s1 = inlined_call_operand.vmem [shape: s32[24,1], index: 1, kind: input, shape index: {}]
  %s2 = inlined_call_operand.vmem [shape: bf16[32,128], index: 2, kind: input, shape index: {}]
  %s3 = inlined_call_operand.hbm [shape: bf16[32,128], index: 3, kind: input, shape index: {}]
  %s4 = inlined_call_operand.vmem [shape: f32[1,128], index: 4, kind: input, shape index: {}]
  %s5 = inlined_call_operand.hbm [shape: f32[24,32], index: 5, kind: output, shape index: {}]
  %s6 = sld [smem:[#allocation0]]
  $region38: #{_lstm_max_fused.1} parent=0
    _
  %s8 = ssub.s32 1, %s6
  %s9 = scalar_select 0, %s8, %s6
  $region1: #{_lstm_max_fused.1} parent=0
    #allocation3 [shape = 'u8[49152]{0}', space=vmem, size = 0xc000, scoped, tag = 'input window, operand 0, single buffered']
    #allocation4 [shape = 's32[1]{0}', space=sflag, size = 0x4, scoped, tag = 'scoped memory for _lstm_max_fused.1']
    #allocation5 [shape = 's32[1]{0}', space=sflag, size = 0x4, scoped, tag = 'scoped memory for _lstm_max_fused.1']
    #allocation6 [shape = 'u8[8192]{0}', space=vmem, size = 0x2000, scoped, tag = 'input window, operand 3, single buffered']
    #allocation7 [shape = 's32[1]{0}', space=sflag, size = 0x4, scoped, tag = 'scoped memory for _lstm_max_fused.1']
    #allocation8 [shape = 'u8[12288]{0}', space=vmem, size = 0x3000, scoped, tag = 'output window, operand 0, single buffered']
    %10 = vsyncpa [#allocation4], 0
    %11 = vsyncpa [#allocation7], 0
    %12 = vsyncpa [#allocation5], 0
    // Predicated region
    $region2: #{_lstm_max_fused.1} parent=1 // pred_check
      _
    $region3: #{_lstm_max_fused.1} parent=1 // pred_check_branch
      %14 = sbr.rel (0) target = $region5
    $region4: #{_lstm_max_fused.1} parent=1 // pred_region
      %s16 = ssub.s32 1536, 1536
      %17 = vsyncadd [#allocation4], %s16
      %s18 = sshll.u32 [#allocation3], 4
      %s19 = int_to_ptr.vmem [resolvable:$true] %s18
      %24 = dma.hbm_to_vmem [thread:$0]  %s0, 1536, %s19, [#allocation4], 64, 64, 4
    $region5: #{_lstm_max_fused.1} parent=1 // pred_fallthru
      _
    // Predicated region
    $region6: #{_lstm_max_fused.1} parent=1 // pred_check
      _
    $region7: #{_lstm_max_fused.1} parent=1 // pred_check_branch
      %26 = sbr.rel (0) target = $region9
    $region8: #{_lstm_max_fused.1} parent=1 // pred_region
      _
    $region9: #{_lstm_max_fused.1} parent=1 // pred_fallthru
      _
    // Predicated region
    $region10: #{_lstm_max_fused.1} parent=1 // pred_check
      _
    $region11: #{_lstm_max_fused.1} parent=1 // pred_check_branch
      %28 = sbr.rel (0) target = $region13
    $region12: #{_lstm_max_fused.1} parent=1 // pred_region
      _
    $region13: #{_lstm_max_fused.1} parent=1 // pred_fallthru
      _
    // Predicated region
    $region14: #{_lstm_max_fused.1} parent=1 // pred_check
      _
    $region15: #{_lstm_max_fused.1} parent=1 // pred_check_branch
      %30 = sbr.rel (0) target = $region17
    $region16: #{_lstm_max_fused.1} parent=1 // pred_region
      %s32 = ssub.s32 256, 256
      %33 = vsyncadd [#allocation7], %s32
      %s34 = sshll.u32 [#allocation6], 4
      %s35 = int_to_ptr.vmem [resolvable:$true] %s34
      %40 = dma.hbm_to_vmem [thread:$0]  %s3, 256, %s35, [#allocation7], 64, 64, 4
    $region17: #{_lstm_max_fused.1} parent=1 // pred_fallthru
      _
    // Predicated region
    $region18: #{_lstm_max_fused.1} parent=1 // pred_check
      _
    $region19: #{_lstm_max_fused.1} parent=1 // pred_check_branch
      %42 = sbr.rel (0) target = $region21
    $region20: #{_lstm_max_fused.1} parent=1 // pred_region
      _
    $region21: #{_lstm_max_fused.1} parent=1 // pred_fallthru
      _
    // Predicated region
    $region22: #{_lstm_max_fused.1} parent=1 // pred_check
      _
    $region23: #{_lstm_max_fused.1} parent=1 // pred_check_branch
      %44 = sbr.rel (0) target = $region25
    $region24: #{_lstm_max_fused.1} parent=1 // pred_region
      %45 = dma.done [#allocation4], 1536
    $region25: #{_lstm_max_fused.1} parent=1 // pred_fallthru
      _
    // Predicated region
    $region26: #{_lstm_max_fused.1} parent=1 // pred_check
      _
    $region27: #{_lstm_max_fused.1} parent=1 // pred_check_branch
      %47 = sbr.rel (0) target = $region29
    $region28: #{_lstm_max_fused.1} parent=1 // pred_region
      %48 = dma.done [#allocation7], 256
    $region29: #{_lstm_max_fused.1} parent=1 // pred_fallthru
      _
    %v50 = vld [vmem:[#allocation3] sm:$0xf]
    %v51 = vld [vmem:[#allocation3 + $0x4] sm:$0xf]
    %v52 = vld [vmem:[#allocation3 + $0x8] sm:$0xf]
    %v53 = vld [vmem:[#allocation3 + $0xc] sm:$0xf]
    %v54 = vld [vmem:[#allocation3 + $0x10] sm:$0xf]
    %v55 = vld [vmem:[#allocation3 + $0x14] sm:$0xf]
    %v56 = vld [vmem:[#allocation3 + $0x18] sm:$0xf]
    %v57 = vld [vmem:[#allocation3 + $0x1c] sm:$0xf]
    %v58 = vld [vmem:[#allocation3 + $0x20] sm:$0xf]
    %v59 = vld [vmem:[#allocation3 + $0x24] sm:$0xf]
    %v60 = vld [vmem:[#allocation3 + $0x28] sm:$0xf]
    %v61 = vld [vmem:[#allocation3 + $0x2c] sm:$0xf]
    %v62 = vld [vmem:[#allocation3 + $0x30] sm:$0xf]
    %v63 = vld [vmem:[#allocation3 + $0x34] sm:$0xf]
    %v64 = vld [vmem:[#allocation3 + $0x38] sm:$0xf]
    %v65 = vld [vmem:[#allocation3 + $0x3c] sm:$0xf]
    %v66 = vld [vmem:[#allocation3 + $0x40] sm:$0xf]
    %v67 = vld [vmem:[#allocation3 + $0x44] sm:$0xf]
    %v68 = vld [vmem:[#allocation3 + $0x48] sm:$0xf]
    %v69 = vld [vmem:[#allocation3 + $0x4c] sm:$0xf]
    %v70 = vld [vmem:[#allocation3 + $0x50] sm:$0xf]
    %v71 = vld [vmem:[#allocation3 + $0x54] sm:$0xf]
    %v72 = vld [vmem:[#allocation3 + $0x58] sm:$0xf]
    %v73 = vld [vmem:[#allocation3 + $0x5c] sm:$0xf]
    %v74 = vld [vmem:[%s2] sm:$0xf]
    %v75 = vld [vmem:[%s2 + $0x4] sm:$0xf]
    %v76 = vld [vmem:[%s2 + $0x8] sm:$0xf]
    %v77 = vld [vmem:[%s2 + $0xc] sm:$0xf]
    %v78 = vld [vmem:[%s4] sm:$0x1]
    %v80 = vlaneseq
    %v81 = vshrl.u32 %v80, 7
    %v82 = vsub.s32 0, %v81
    %v83 = vrot.slane %v78, %v82
    %v109 = vunpack.c.l.b16 %v50
    %v110 = vunpack.c.l.b16 %v51
    %v111 = vunpack.c.l.b16 %v52
    %v112 = vunpack.c.l.b16 %v53
    %v113 = vunpack.c.l.b16 %v54
    %v114 = vunpack.c.l.b16 %v55
    %v115 = vunpack.c.l.b16 %v56
    %v116 = vunpack.c.l.b16 %v57
    %v117 = vunpack.c.l.b16 %v58
    %v118 = vunpack.c.l.b16 %v59
    %v119 = vunpack.c.l.b16 %v60
    %v120 = vunpack.c.l.b16 %v61
    %v121 = vunpack.c.l.b16 %v62
    %v122 = vunpack.c.l.b16 %v63
    %v123 = vunpack.c.l.b16 %v64
    %v124 = vunpack.c.l.b16 %v65
    %v125 = vunpack.c.l.b16 %v66
    %v126 = vunpack.c.l.b16 %v67
    %v127 = vunpack.c.l.b16 %v68
    %v128 = vunpack.c.l.b16 %v69
    %v129 = vunpack.c.l.b16 %v70
    %v130 = vunpack.c.l.b16 %v71
    %v131 = vunpack.c.l.b16 %v72
    %v132 = vunpack.c.l.b16 %v73
    %v133 = vpack.c.b16 %v110, %v109
    %v134 = vpack.c.b16 %v112, %v111
    %v135 = vpack.c.b16 %v114, %v113
    %v136 = vpack.c.b16 %v116, %v115
    %v137 = vpack.c.b16 %v118, %v117
    %v138 = vpack.c.b16 %v120, %v119
    %v139 = vpack.c.b16 %v122, %v121
    %v140 = vpack.c.b16 %v124, %v123
    %v141 = vpack.c.b16 %v126, %v125
    %v142 = vpack.c.b16 %v128, %v127
    %v143 = vpack.c.b16 %v130, %v129
    %v144 = vpack.c.b16 %v132, %v131
    %v149 = vunpack.c.l.b16 %v74
    %v150 = vunpack.c.l.b16 %v75
    %v151 = vunpack.c.l.b16 %v76
    %v152 = vunpack.c.l.b16 %v77
    %v153 = vpack.c.b16 %v150, %v149
    %v154 = vpack.c.b16 %v152, %v151
    %vm157 = vcmask 261120
    %v159 = vsel %vm157, %v133, 0
    %v162 = vsel %vm157, %v134, 0
    %v165 = vsel %vm157, %v135, 0
    %v168 = vsel %vm157, %v136, 0
    %v171 = vsel %vm157, %v137, 0
    %v174 = vsel %vm157, %v138, 0
    %v177 = vsel %vm157, %v139, 0
    %v180 = vsel %vm157, %v140, 0
    %v183 = vsel %vm157, %v141, 0
    %v186 = vsel %vm157, %v142, 0
    %v189 = vsel %vm157, %v143, 0
    %v192 = vsel %vm157, %v144, 0
    %194 = vmatprep.subr.bf16.mxu0 0
    %195 = vmatpush1.bf16.msra.mxu0 0
    %196 = vmatprep.subr.bf16.mxu0 0
    %197 = vmatpush1.bf16.msra.mxu0 0
    %198 = vmatprep.subr.bf16.mxu0 0
    %199 = vmatpush1.bf16.msra.mxu0 0
    %200 = vmatprep.subr.bf16.mxu0 0
    %201 = vmatpush1.bf16.msra.mxu0 0
    %202 = vmatprep.subr.bf16.mxu0 0
    %203 = vmatpush1.bf16.msra.mxu0 0
    %204 = vmatprep.subr.bf16.mxu0 0
    %205 = vmatpush1.bf16.msra.mxu0 0
    %206 = vmatprep.subr.bf16.mxu0 0
    %207 = vmatpush1.bf16.msra.mxu0 %v154
    %208 = vmatprep.subr.bf16.mxu0 0
    %209 = vmatpush1.bf16.msra.mxu0 %v153
    %210 = vmatprep.subr.bf16.mxu0 0
    %211 = vmatpush2.bf16.msra.mxu0 0
    %212 = vmatprep.subr.bf16.mxu0 0
    %213 = vmatpush2.bf16.msra.mxu0 0
    %214 = vmatprep.subr.bf16.mxu0 0
    %215 = vmatpush2.bf16.msra.mxu0 0
    %216 = vmatprep.subr.bf16.mxu0 0
    %217 = vmatpush2.bf16.msra.mxu0 0
    %218 = vmatprep.subr.bf16.mxu0 0
    %219 = vmatpush2.bf16.msra.mxu0 0
    %220 = vmatprep.subr.bf16.mxu0 0
    %221 = vmatpush2.bf16.msra.mxu0 0
    %222 = vmatprep.subr.bf16.mxu0 0
    %223 = vmatpush2.bf16.msra.mxu0 0
    %224 = vmatprep.subr.bf16.mxu0 0
    %225 = vmatpush2.bf16.msra.mxu0 0
    %226 = vmatprep.mubr.bf16.mxu0 0
    %227 = vmatmul.mubr.bf16.gmra.mxu0 %v159
    %v228 = vpop.f32.mrf.mxu0
    %v229 = vadd.f32 %v83, %v228
    %v230 = vpop.f32.mrf.mxu0
    %v231 = vpop.f32.mrf.mxu0
    %v232 = vadd.f32 %v83, %v231
    %v233 = vpop.f32.mrf.mxu0
    %234 = vmatprep.mubr.bf16.mxu0 0
    %235 = vmatmul.mubr.bf16.gmra.mxu0 %v162
    %v236 = vpop.f32.mrf.mxu0
    %v237 = vadd.f32 %v83, %v236
    %v238 = vpop.f32.mrf.mxu0
    %v239 = vpop.f32.mrf.mxu0
    %v240 = vadd.f32 %v83, %v239
    %v241 = vpop.f32.mrf.mxu0
    %242 = vmatprep.mubr.bf16.mxu0 0
    %243 = vmatmul.mubr.bf16.gmra.mxu0 %v165
    %v244 = vpop.f32.mrf.mxu0
    %v245 = vadd.f32 %v83, %v244
    %v246 = vpop.f32.mrf.mxu0
    %v247 = vpop.f32.mrf.mxu0
    %v248 = vadd.f32 %v83, %v247
    %v249 = vpop.f32.mrf.mxu0
    %250 = vmatprep.mubr.bf16.mxu0 0
    %251 = vmatmul.mubr.bf16.gmra.mxu0 %v168
    %v252 = vpop.f32.mrf.mxu0
    %v253 = vadd.f32 %v83, %v252
    %v254 = vpop.f32.mrf.mxu0
    %v255 = vpop.f32.mrf.mxu0
    %v256 = vadd.f32 %v83, %v255
    %v257 = vpop.f32.mrf.mxu0
    %258 = vmatprep.mubr.bf16.mxu0 0
    %259 = vmatmul.mubr.bf16.gmra.mxu0 %v171
    %v260 = vpop.f32.mrf.mxu0
    %v261 = vadd.f32 %v83, %v260
    %v262 = vpop.f32.mrf.mxu0
    %v263 = vpop.f32.mrf.mxu0
    %v264 = vadd.f32 %v83, %v263
    %v265 = vpop.f32.mrf.mxu0
    %266 = vmatprep.mubr.bf16.mxu0 0
    %267 = vmatmul.mubr.bf16.gmra.mxu0 %v174
    %v268 = vpop.f32.mrf.mxu0
    %v269 = vadd.f32 %v83, %v268
    %v270 = vpop.f32.mrf.mxu0
    %v271 = vpop.f32.mrf.mxu0
    %v272 = vadd.f32 %v83, %v271
    %v273 = vpop.f32.mrf.mxu0
    %274 = vmatprep.mubr.bf16.mxu0 0
    %275 = vmatmul.mubr.bf16.gmra.mxu0 %v177
    %v276 = vpop.f32.mrf.mxu0
    %v277 = vadd.f32 %v83, %v276
    %v278 = vpop.f32.mrf.mxu0
    %v279 = vpop.f32.mrf.mxu0
    %v280 = vadd.f32 %v83, %v279
    %v281 = vpop.f32.mrf.mxu0
    %282 = vmatprep.mubr.bf16.mxu0 0
    %283 = vmatmul.mubr.bf16.gmra.mxu0 %v180
    %v284 = vpop.f32.mrf.mxu0
    %v285 = vadd.f32 %v83, %v284
    %v286 = vpop.f32.mrf.mxu0
    %v287 = vpop.f32.mrf.mxu0
    %v288 = vadd.f32 %v83, %v287
    %v289 = vpop.f32.mrf.mxu0
    %290 = vmatprep.mubr.bf16.mxu0 0
    %291 = vmatmul.mubr.bf16.gmra.mxu0 %v183
    %v292 = vpop.f32.mrf.mxu0
    %v293 = vadd.f32 %v83, %v292
    %v294 = vpop.f32.mrf.mxu0
    %v295 = vpop.f32.mrf.mxu0
    %v296 = vadd.f32 %v83, %v295
    %v297 = vpop.f32.mrf.mxu0
    %298 = vmatprep.mubr.bf16.mxu0 0
    %299 = vmatmul.mubr.bf16.gmra.mxu0 %v186
    %v300 = vpop.f32.mrf.mxu0
    %v301 = vadd.f32 %v83, %v300
    %v302 = vpop.f32.mrf.mxu0
    %v303 = vpop.f32.mrf.mxu0
    %v304 = vadd.f32 %v83, %v303
    %v305 = vpop.f32.mrf.mxu0
    %306 = vmatprep.mubr.bf16.mxu0 0
    %307 = vmatmul.mubr.bf16.gmra.mxu0 %v189
    %v308 = vpop.f32.mrf.mxu0
    %v309 = vadd.f32 %v83, %v308
    %v310 = vpop.f32.mrf.mxu0
    %v311 = vpop.f32.mrf.mxu0
    %v312 = vadd.f32 %v83, %v311
    %v313 = vpop.f32.mrf.mxu0
    %314 = vmatprep.mubr.bf16.mxu0 0
    %315 = vmatmul.mubr.bf16.gmra.mxu0 %v192
    %v316 = vpop.f32.mrf.mxu0
    %v317 = vadd.f32 %v83, %v316
    %v318 = vpop.f32.mrf.mxu0
    %v319 = vpop.f32.mrf.mxu0
    %v320 = vadd.f32 %v83, %v319
    %v321 = vpop.f32.mrf.mxu0
    %322 = vdwg.mxu0
    %323 = vst [vmem:[#allocation2] sm:$0xff] %v229
    %324 = vst [vmem:[#allocation2 + $0x8] sm:$0xff] %v232
    %325 = vst [vmem:[#allocation2 + $0x10] sm:$0xff] %v237
    %326 = vst [vmem:[#allocation2 + $0x18] sm:$0xff] %v240
    %327 = vst [vmem:[#allocation2 + $0x20] sm:$0xff] %v245
    %328 = vst [vmem:[#allocation2 + $0x28] sm:$0xff] %v248
    %329 = vst [vmem:[#allocation2 + $0x30] sm:$0xff] %v253
    %330 = vst [vmem:[#allocation2 + $0x38] sm:$0xff] %v256
    %331 = vst [vmem:[#allocation2 + $0x40] sm:$0xff] %v261
    %332 = vst [vmem:[#allocation2 + $0x48] sm:$0xff] %v264
    %333 = vst [vmem:[#allocation2 + $0x50] sm:$0xff] %v269
    %334 = vst [vmem:[#allocation2 + $0x58] sm:$0xff] %v272
    %335 = vst [vmem:[#allocation2 + $0x60] sm:$0xff] %v277
    %336 = vst [vmem:[#allocation2 + $0x68] sm:$0xff] %v280
    %337 = vst [vmem:[#allocation2 + $0x70] sm:$0xff] %v285
    %338 = vst [vmem:[#allocation2 + $0x78] sm:$0xff] %v288
    %339 = vst [vmem:[#allocation2 + $0x80] sm:$0xff] %v293
    %340 = vst [vmem:[#allocation2 + $0x88] sm:$0xff] %v296
    %341 = vst [vmem:[#allocation2 + $0x90] sm:$0xff] %v301
    %342 = vst [vmem:[#allocation2 + $0x98] sm:$0xff] %v304
    %343 = vst [vmem:[#allocation2 + $0xa0] sm:$0xff] %v309
    %344 = vst [vmem:[#allocation2 + $0xa8] sm:$0xff] %v312
    %345 = vst [vmem:[#allocation2 + $0xb0] sm:$0xff] %v317
    %346 = vst [vmem:[#allocation2 + $0xb8] sm:$0xff] %v320
    %v347 = vld [vmem:[%s1] sm:$0xff]
    %v348 = vld [vmem:[%s1 + $0x8] sm:$0xff]
    %v349 = vld [vmem:[%s1 + $0x10] sm:$0xff]
    %350 = vset.pattern.permute.xlu0 0
    %351 = vperm.xlu0 %350, %v347
    %v352 = vpop.permute.xlu0 %351
    %353 = vset.pattern.permute.xlu0 0
    %354 = vperm.xlu0 %353, %v348
    %v355 = vpop.permute.xlu0 %354
    %356 = vset.pattern.permute.xlu0 0
    %357 = vperm.xlu0 %356, %v349
    %v358 = vpop.permute.xlu0 %357
    %v359 = vld [vmem:[#allocation6] sm:$0xf]
    %v360 = vld [vmem:[#allocation6 + $0x4] sm:$0xf]
    %v361 = vld [vmem:[#allocation6 + $0x8] sm:$0xf]
    %v362 = vld [vmem:[#allocation6 + $0xc] sm:$0xf]
    %v363 = vld [vmem:[#allocation2] sm:$0xff]
    %v364 = vld [vmem:[#allocation2 + $0x8] sm:$0xff]
    %v365 = vld [vmem:[#allocation2 + $0x10] sm:$0xff]
    %v370 = vunpack.c.l.b16 %v359
    %v371 = vunpack.c.l.b16 %v360
    %v372 = vunpack.c.l.b16 %v361
    %v373 = vunpack.c.l.b16 %v362
    %v374 = vpack.c.b16 %v371, %v370
    %v375 = vpack.c.b16 %v373, %v372
    %v379 = vsel %vm157, 0, 0
    %381 = vmatprep.subr.bf16.mxu0 0
    %382 = vmatpush1.bf16.msra.mxu0 0
    %383 = vmatprep.subr.bf16.mxu0 0
    %384 = vmatpush1.bf16.msra.mxu0 0
    %385 = vmatprep.subr.bf16.mxu0 0
    %386 = vmatpush1.bf16.msra.mxu0 0
    %387 = vmatprep.subr.bf16.mxu0 0
    %388 = vmatpush1.bf16.msra.mxu0 0
    %389 = vmatprep.subr.bf16.mxu0 0
    %390 = vmatpush1.bf16.msra.mxu0 0
    %391 = vmatprep.subr.bf16.mxu0 0
    %392 = vmatpush1.bf16.msra.mxu0 0
    %393 = vmatprep.subr.bf16.mxu0 0
    %394 = vmatpush1.bf16.msra.mxu0 %v375
    %395 = vmatprep.subr.bf16.mxu0 0
    %396 = vmatpush1.bf16.msra.mxu0 %v374
    %397 = vmatprep.subr.bf16.mxu0 0
    %398 = vmatpush2.bf16.msra.mxu0 0
    %399 = vmatprep.subr.bf16.mxu0 0
    %400 = vmatpush2.bf16.msra.mxu0 0
    %401 = vmatprep.subr.bf16.mxu0 0
    %402 = vmatpush2.bf16.msra.mxu0 0
    %403 = vmatprep.subr.bf16.mxu0 0
    %404 = vmatpush2.bf16.msra.mxu0 0
    %405 = vmatprep.subr.bf16.mxu0 0
    %406 = vmatpush2.bf16.msra.mxu0 0
    %407 = vmatprep.subr.bf16.mxu0 0
    %408 = vmatpush2.bf16.msra.mxu0 0
    %409 = vmatprep.subr.bf16.mxu0 0
    %410 = vmatpush2.bf16.msra.mxu0 0
    %411 = vmatprep.subr.bf16.mxu0 0
    %412 = vmatpush2.bf16.msra.mxu0 0
    %413 = vmatprep.mubr.bf16.mxu0 0
    %414 = vmatmul.mubr.bf16.gmra.mxu0 %v379
    %v415 = vpop.f32.mrf.mxu0
    %v416 = vadd.f32 0.0, %v415
    %v417 = vpop.f32.mrf.mxu0
    %v418 = vpop.f32.mrf.mxu0
    %v419 = vadd.f32 0.0, %v418
    %v420 = vpop.f32.mrf.mxu0
    %421 = vmatprep.mubr.bf16.mxu0 0
    %422 = vmatmul.mubr.bf16.gmra.mxu0 %v379
    %v423 = vpop.f32.mrf.mxu0
    %v424 = vadd.f32 0.0, %v423
    %v425 = vpop.f32.mrf.mxu0
    %v426 = vpop.f32.mrf.mxu0
    %v427 = vpop.f32.mrf.mxu0
    %428 = vdwg.mxu0
    %v429 = vadd.f32 %v363, %v416
    %v430 = vadd.f32 %v364, %v419
    %v431 = vadd.f32 %v365, %v424
    %v432 = vxor.u32 %v429, 2147483648
    %v433 = vxor.u32 %v430, 2147483648
    %v434 = vxor.u32 %v431, 2147483648
    %v435 = vmul.f32 %v432, 1.442695
    %v436 = vpow.pop %v435
    %v437 = vmul.f32 %v433, 1.442695
    %v438 = vpow.pop %v437
    %v439 = vmul.f32 %v434, 1.442695
    %v440 = vpow.pop %v439
    %v441 = vadd.f32 %v436, 1.0
    %v442 = vadd.f32 %v438, 1.0
    %v443 = vadd.f32 %v440, 1.0
    %v444 = vrcp.pop %v441
    %v445 = vmul.f32 1.0, %v444
    %v446 = vrcp.pop %v442
    %v447 = vmul.f32 1.0, %v446
    %v448 = vrcp.pop %v443
    %v449 = vmul.f32 1.0, %v448
    %v450 = vtanh.pop %v429
    %v451 = vtanh.pop %v430
    %v452 = vtanh.pop %v431
    %v453 = vmul.f32 %v445, 0.0
    %v454 = vmul.f32 %v447, 0.0
    %v455 = vmul.f32 %v449, 0.0
    %459 = vrot.lane.b32.xlu0 %v450, 64
    %v460 = vpop.permute.xlu0 %459
    %461 = vrot.lane.b32.xlu0 %v451, 64
    %v462 = vpop.permute.xlu0 %461
    %463 = vrot.lane.b32.xlu0 %v452, 64
    %v464 = vpop.permute.xlu0 %463
    %v468 = vmul.f32 %v445, %v460
    %v469 = vmul.f32 %v447, %v462
    %v470 = vmul.f32 %v449, %v464
    %474 = vrot.lane.b32.xlu0 %v468, 32
    %v475 = vpop.permute.xlu0 %474
    %476 = vrot.lane.b32.xlu0 %v469, 32
    %v477 = vpop.permute.xlu0 %476
    %478 = vrot.lane.b32.xlu0 %v470, 32
    %v479 = vpop.permute.xlu0 %478
    %v483 = vadd.f32 %v453, %v475
    %v484 = vadd.f32 %v454, %v477
    %v485 = vadd.f32 %v455, %v479
    %v486 = vtanh.pop %v483
    %v487 = vtanh.pop %v484
    %v488 = vtanh.pop %v485
    %492 = vrot.lane.b32.xlu0 %v486, 64
    %v493 = vpop.permute.xlu0 %492
    %494 = vrot.lane.b32.xlu0 %v487, 64
    %v495 = vpop.permute.xlu0 %494
    %496 = vrot.lane.b32.xlu0 %v488, 64
    %v497 = vpop.permute.xlu0 %496
    %v501 = vmul.f32 %v445, %v493
    %v502 = vmul.f32 %v447, %v495
    %v503 = vmul.f32 %v449, %v497
    %vm504 = vcmp.gt.s32.totalorder %v352, 0
    %vm505 = vcmp.gt.s32.totalorder %v355, 0
    %vm506 = vcmp.gt.s32.totalorder %v358, 0
    %v507 = vsel %vm504, %v501, 0.0
    %v508 = vsel %vm505, %v502, 0.0
    %v509 = vsel %vm506, %v503, 0.0
    %s510 = scalar_lea.vmem [#allocation2], 24
    %v511 = vld [vmem:[%s510] sm:$0xff]
    %v512 = vld [vmem:[%s510 + $0x8] sm:$0xff]
    %v513 = vld [vmem:[%s510 + $0x10] sm:$0xff]
    %v514 = vpack.c.bf16 %v502, %v501
    %v515 = vpack.c.bf16 %v503, %v503
    %518 = vrot.lane.b32.xlu0 %v514, 32
    %v519 = vpop.permute.xlu0 %518
    %520 = vrot.lane.b32.xlu0 %v515, 32
    %v521 = vpop.permute.xlu0 %520
    %v523 = vsel %vm157, %v519, 0
    %v526 = vsel %vm157, %v521, 0
    %528 = vmatprep.subr.bf16.mxu0 0
    %529 = vmatpush1.bf16.msra.mxu0 0
    %530 = vmatprep.subr.bf16.mxu0 0
    %531 = vmatpush1.bf16.msra.mxu0 0
    %532 = vmatprep.subr.bf16.mxu0 0
    %533 = vmatpush1.bf16.msra.mxu0 0
    %534 = vmatprep.subr.bf16.mxu0 0
    %535 = vmatpush1.bf16.msra.mxu0 0
    %536 = vmatprep.subr.bf16.mxu0 0
    %537 = vmatpush1.bf16.msra.mxu0 0
    %538 = vmatprep.subr.bf16.mxu0 0
    %539 = vmatpush1.bf16.msra.mxu0 0
    %540 = vmatprep.subr.bf16.mxu0 0
    %541 = vmatpush1.bf16.msra.mxu0 %v375
    %542 = vmatprep.subr.bf16.mxu0 0
    %543 = vmatpush1.bf16.msra.mxu0 %v374
    %544 = vmatprep.subr.bf16.mxu0 0
    %545 = vmatpush2.bf16.msra.mxu0 0
    %546 = vmatprep.subr.bf16.mxu0 0
    %547 = vmatpush2.bf16.msra.mxu0 0
    %548 = vmatprep.subr.bf16.mxu0 0
    %549 = vmatpush2.bf16.msra.mxu0 0
    %550 = vmatprep.subr.bf16.mxu0 0
    %551 = vmatpush2.bf16.msra.mxu0 0
    %552 = vmatprep.subr.bf16.mxu0 0
    %553 = vmatpush2.bf16.msra.mxu0 0
    %554 = vmatprep.subr.bf16.mxu0 0
    %555 = vmatpush2.bf16.msra.mxu0 0
    %556 = vmatprep.subr.bf16.mxu0 0
    %557 = vmatpush2.bf16.msra.mxu0 0
    %558 = vmatprep.subr.bf16.mxu0 0
    %559 = vmatpush2.bf16.msra.mxu0 0
    %560 = vmatprep.mubr.bf16.mxu0 0
    %561 = vmatmul.mubr.bf16.gmra.mxu0 %v523
    %v562 = vpop.f32.mrf.mxu0
    %v563 = vadd.f32 0.0, %v562
    %v564 = vpop.f32.mrf.mxu0
    %v565 = vpop.f32.mrf.mxu0
    %v566 = vadd.f32 0.0, %v565
    %v567 = vpop.f32.mrf.mxu0
    %568 = vmatprep.mubr.bf16.mxu0 0
    %569 = vmatmul.mubr.bf16.gmra.mxu0 %v526
    %v570 = vpop.f32.mrf.mxu0
    %v571 = vadd.f32 0.0, %v570
    %v572 = vpop.f32.mrf.mxu0
    %v573 = vpop.f32.mrf.mxu0
    %v574 = vpop.f32.mrf.mxu0
    %575 = vdwg.mxu0
    %v576 = vadd.f32 %v511, %v563
    %v577 = vadd.f32 %v512, %v566
    %v578 = vadd.f32 %v513, %v571
    %v579 = vxor.u32 %v576, 2147483648
    %v580 = vxor.u32 %v577, 2147483648
    %v581 = vxor.u32 %v578, 2147483648
    %v582 = vmul.f32 %v579, 1.442695
    %v583 = vpow.pop %v582
    %v584 = vmul.f32 %v580, 1.442695
    %v585 = vpow.pop %v584
    %v586 = vmul.f32 %v581, 1.442695
    %v587 = vpow.pop %v586
    %v588 = vadd.f32 %v583, 1.0
    %v589 = vadd.f32 %v585, 1.0
    %v590 = vadd.f32 %v587, 1.0
    %v591 = vrcp.pop %v588
    %v592 = vmul.f32 1.0, %v591
    %v593 = vrcp.pop %v589
    %v594 = vmul.f32 1.0, %v593
    %v595 = vrcp.pop %v590
    %v596 = vmul.f32 1.0, %v595
    %v597 = vtanh.pop %v576
    %v598 = vtanh.pop %v577
    %v599 = vtanh.pop %v578
    %v600 = vmul.f32 %v592, %v483
    %v601 = vmul.f32 %v594, %v484
    %v602 = vmul.f32 %v596, %v485
    %606 = vrot.lane.b32.xlu0 %v597, 64
    %v607 = vpop.permute.xlu0 %606
    %608 = vrot.lane.b32.xlu0 %v598, 64
    %v609 = vpop.permute.xlu0 %608
    %610 = vrot.lane.b32.xlu0 %v599, 64
    %v611 = vpop.permute.xlu0 %610
    %v615 = vmul.f32 %v592, %v607
    %v616 = vmul.f32 %v594, %v609
    %v617 = vmul.f32 %v596, %v611
    %621 = vrot.lane.b32.xlu0 %v615, 32
    %v622 = vpop.permute.xlu0 %621
    %623 = vrot.lane.b32.xlu0 %v616, 32
    %v624 = vpop.permute.xlu0 %623
    %625 = vrot.lane.b32.xlu0 %v617, 32
    %v626 = vpop.permute.xlu0 %625
    %v630 = vadd.f32 %v600, %v622
    %v631 = vadd.f32 %v601, %v624
    %v632 = vadd.f32 %v602, %v626
    %v633 = vtanh.pop %v630
    %v634 = vtanh.pop %v631
    %v635 = vtanh.pop %v632
    %639 = vrot.lane.b32.xlu0 %v633, 64
    %v640 = vpop.permute.xlu0 %639
    %641 = vrot.lane.b32.xlu0 %v634, 64
    %v642 = vpop.permute.xlu0 %641
    %643 = vrot.lane.b32.xlu0 %v635, 64
    %v644 = vpop.permute.xlu0 %643
    %v648 = vmul.f32 %v592, %v640
    %v649 = vmul.f32 %v594, %v642
    %v650 = vmul.f32 %v596, %v644
    %vm651 = vcmp.gt.s32.totalorder %v352, 1
    %vm652 = vcmp.gt.s32.totalorder %v355, 1
    %vm653 = vcmp.gt.s32.totalorder %v358, 1
    %v654 = vsel %vm651, %v648, 0.0
    %v655 = vsel %vm652, %v649, 0.0
    %v656 = vsel %vm653, %v650, 0.0
    %v657 = vmax.f32 %v507, %v654
    %v658 = vmax.f32 %v508, %v655
    %v659 = vmax.f32 %v509, %v656
    %s660 = scalar_lea.vmem [#allocation2], 48
    %v661 = vld [vmem:[%s660] sm:$0xff]
    %v662 = vld [vmem:[%s660 + $0x8] sm:$0xff]
    %v663 = vld [vmem:[%s660 + $0x10] sm:$0xff]
    %v664 = vpack.c.bf16 %v649, %v648
    %v665 = vpack.c.bf16 %v650, %v650
    %668 = vrot.lane.b32.xlu0 %v664, 32
    %v669 = vpop.permute.xlu0 %668
    %670 = vrot.lane.b32.xlu0 %v665, 32
    %v671 = vpop.permute.xlu0 %670
    %v673 = vsel %vm157, %v669, 0
    %v676 = vsel %vm157, %v671, 0
    %678 = vmatprep.subr.bf16.mxu0 0
    %679 = vmatpush1.bf16.msra.mxu0 0
    %680 = vmatprep.subr.bf16.mxu0 0
    %681 = vmatpush1.bf16.msra.mxu0 0
    %682 = vmatprep.subr.bf16.mxu0 0
    %683 = vmatpush1.bf16.msra.mxu0 0
    %684 = vmatprep.subr.bf16.mxu0 0
    %685 = vmatpush1.bf16.msra.mxu0 0
    %686 = vmatprep.subr.bf16.mxu0 0
    %687 = vmatpush1.bf16.msra.mxu0 0
    %688 = vmatprep.subr.bf16.mxu0 0
    %689 = vmatpush1.bf16.msra.mxu0 0
    %690 = vmatprep.subr.bf16.mxu0 0
    %691 = vmatpush1.bf16.msra.mxu0 %v375
    %692 = vmatprep.subr.bf16.mxu0 0
    %693 = vmatpush1.bf16.msra.mxu0 %v374
    %694 = vmatprep.subr.bf16.mxu0 0
    %695 = vmatpush2.bf16.msra.mxu0 0
    %696 = vmatprep.subr.bf16.mxu0 0
    %697 = vmatpush2.bf16.msra.mxu0 0
    %698 = vmatprep.subr.bf16.mxu0 0
    %699 = vmatpush2.bf16.msra.mxu0 0
    %700 = vmatprep.subr.bf16.mxu0 0
    %701 = vmatpush2.bf16.msra.mxu0 0
    %702 = vmatprep.subr.bf16.mxu0 0
    %703 = vmatpush2.bf16.msra.mxu0 0
    %704 = vmatprep.subr.bf16.mxu0 0
    %705 = vmatpush2.bf16.msra.mxu0 0
    %706 = vmatprep.subr.bf16.mxu0 0
    %707 = vmatpush2.bf16.msra.mxu0 0
    %708 = vmatprep.subr.bf16.mxu0 0
    %709 = vmatpush2.bf16.msra.mxu0 0
    %710 = vmatprep.mubr.bf16.mxu0 0
    %711 = vmatmul.mubr.bf16.gmra.mxu0 %v673
    %v712 = vpop.f32.mrf.mxu0
    %v713 = vadd.f32 0.0, %v712
    %v714 = vpop.f32.mrf.mxu0
    %v715 = vpop.f32.mrf.mxu0
    %v716 = vadd.f32 0.0, %v715
    %v717 = vpop.f32.mrf.mxu0
    %718 = vmatprep.mubr.bf16.mxu0 0
    %719 = vmatmul.mubr.bf16.gmra.mxu0 %v676
    %v720 = vpop.f32.mrf.mxu0
    %v721 = vadd.f32 0.0, %v720
    %v722 = vpop.f32.mrf.mxu0
    %v723 = vpop.f32.mrf.mxu0
    %v724 = vpop.f32.mrf.mxu0
    %725 = vdwg.mxu0
    %v726 = vadd.f32 %v661, %v713
    %v727 = vadd.f32 %v662, %v716
    %v728 = vadd.f32 %v663, %v721
    %v729 = vxor.u32 %v726, 2147483648
    %v730 = vxor.u32 %v727, 2147483648
    %v731 = vxor.u32 %v728, 2147483648
    %v732 = vmul.f32 %v729, 1.442695
    %v733 = vpow.pop %v732
    %v734 = vmul.f32 %v730, 1.442695
    %v735 = vpow.pop %v734
    %v736 = vmul.f32 %v731, 1.442695
    %v737 = vpow.pop %v736
    %v738 = vadd.f32 %v733, 1.0
    %v739 = vadd.f32 %v735, 1.0
    %v740 = vadd.f32 %v737, 1.0
    %v741 = vrcp.pop %v738
    %v742 = vmul.f32 1.0, %v741
    %v743 = vrcp.pop %v739
    %v744 = vmul.f32 1.0, %v743
    %v745 = vrcp.pop %v740
    %v746 = vmul.f32 1.0, %v745
    %v747 = vtanh.pop %v726
    %v748 = vtanh.pop %v727
    %v749 = vtanh.pop %v728
    %v750 = vmul.f32 %v742, %v630
    %v751 = vmul.f32 %v744, %v631
    %v752 = vmul.f32 %v746, %v632
    %756 = vrot.lane.b32.xlu0 %v747, 64
    %v757 = vpop.permute.xlu0 %756
    %758 = vrot.lane.b32.xlu0 %v748, 64
    %v759 = vpop.permute.xlu0 %758
    %760 = vrot.lane.b32.xlu0 %v749, 64
    %v761 = vpop.permute.xlu0 %760
    %v765 = vmul.f32 %v742, %v757
    %v766 = vmul.f32 %v744, %v759
    %v767 = vmul.f32 %v746, %v761
    %771 = vrot.lane.b32.xlu0 %v765, 32
    %v772 = vpop.permute.xlu0 %771
    %773 = vrot.lane.b32.xlu0 %v766, 32
    %v774 = vpop.permute.xlu0 %773
    %775 = vrot.lane.b32.xlu0 %v767, 32
    %v776 = vpop.permute.xlu0 %775
    %v780 = vadd.f32 %v750, %v772
    %v781 = vadd.f32 %v751, %v774
    %v782 = vadd.f32 %v752, %v776
    %v783 = vtanh.pop %v780
    %v784 = vtanh.pop %v781
    %v785 = vtanh.pop %v782
    %789 = vrot.lane.b32.xlu0 %v783, 64
    %v790 = vpop.permute.xlu0 %789
    %791 = vrot.lane.b32.xlu0 %v784, 64
    %v792 = vpop.permute.xlu0 %791
    %793 = vrot.lane.b32.xlu0 %v785, 64
    %v794 = vpop.permute.xlu0 %793
    %v798 = vmul.f32 %v742, %v790
    %v799 = vmul.f32 %v744, %v792
    %v800 = vmul.f32 %v746, %v794
    %vm801 = vcmp.gt.s32.totalorder %v352, 2
    %vm802 = vcmp.gt.s32.totalorder %v355, 2
    %vm803 = vcmp.gt.s32.totalorder %v358, 2
    %v804 = vsel %vm801, %v798, 0.0
    %v805 = vsel %vm802, %v799, 0.0
    %v806 = vsel %vm803, %v800, 0.0
    %v807 = vmax.f32 %v657, %v804
    %v808 = vmax.f32 %v658, %v805
    %v809 = vmax.f32 %v659, %v806
    %s810 = scalar_lea.vmem [#allocation2], 72
    %v811 = vld [vmem:[%s810] sm:$0xff]
    %v812 = vld [vmem:[%s810 + $0x8] sm:$0xff]
    %v813 = vld [vmem:[%s810 + $0x10] sm:$0xff]
    %v814 = vpack.c.bf16 %v799, %v798
    %v815 = vpack.c.bf16 %v800, %v800
    %818 = vrot.lane.b32.xlu0 %v814, 32
    %v819 = vpop.permute.xlu0 %818
    %820 = vrot.lane.b32.xlu0 %v815, 32
    %v821 = vpop.permute.xlu0 %820
    %v823 = vsel %vm157, %v819, 0
    %v826 = vsel %vm157, %v821, 0
    %828 = vmatprep.subr.bf16.mxu0 0
    %829 = vmatpush1.bf16.msra.mxu0 0
    %830 = vmatprep.subr.bf16.mxu0 0
    %831 = vmatpush1.bf16.msra.mxu0 0
    %832 = vmatprep.subr.bf16.mxu0 0
    %833 = vmatpush1.bf16.msra.mxu0 0
    %834 = vmatprep.subr.bf16.mxu0 0
    %835 = vmatpush1.bf16.msra.mxu0 0
    %836 = vmatprep.subr.bf16.mxu0 0
    %837 = vmatpush1.bf16.msra.mxu0 0
    %838 = vmatprep.subr.bf16.mxu0 0
    %839 = vmatpush1.bf16.msra.mxu0 0
    %840 = vmatprep.subr.bf16.mxu0 0
    %841 = vmatpush1.bf16.msra.mxu0 %v375
    %842 = vmatprep.subr.bf16.mxu0 0
    %843 = vmatpush1.bf16.msra.mxu0 %v374
    %844 = vmatprep.subr.bf16.mxu0 0
    %845 = vmatpush2.bf16.msra.mxu0 0
    %846 = vmatprep.subr.bf16.mxu0 0
    %847 = vmatpush2.bf16.msra.mxu0 0
    %848 = vmatprep.subr.bf16.mxu0 0
    %849 = vmatpush2.bf16.msra.mxu0 0
    %850 = vmatprep.subr.bf16.mxu0 0
    %851 = vmatpush2.bf16.msra.mxu0 0
    %852 = vmatprep.subr.bf16.mxu0 0
    %853 = vmatpush2.bf16.msra.mxu0 0
    %854 = vmatprep.subr.bf16.mxu0 0
    %855 = vmatpush2.bf16.msra.mxu0 0
    %856 = vmatprep.subr.bf16.mxu0 0
    %857 = vmatpush2.bf16.msra.mxu0 0
    %858 = vmatprep.subr.bf16.mxu0 0
    %859 = vmatpush2.bf16.msra.mxu0 0
    %860 = vmatprep.mubr.bf16.mxu0 0
    %861 = vmatmul.mubr.bf16.gmra.mxu0 %v823
    %v862 = vpop.f32.mrf.mxu0
    %v863 = vadd.f32 0.0, %v862
    %v864 = vpop.f32.mrf.mxu0
    %v865 = vpop.f32.mrf.mxu0
    %v866 = vadd.f32 0.0, %v865
    %v867 = vpop.f32.mrf.mxu0
    %868 = vmatprep.mubr.bf16.mxu0 0
    %869 = vmatmul.mubr.bf16.gmra.mxu0 %v826
    %v870 = vpop.f32.mrf.mxu0
    %v871 = vadd.f32 0.0, %v870
    %v872 = vpop.f32.mrf.mxu0
    %v873 = vpop.f32.mrf.mxu0
    %v874 = vpop.f32.mrf.mxu0
    %875 = vdwg.mxu0
    %v876 = vadd.f32 %v811, %v863
    %v877 = vadd.f32 %v812, %v866
    %v878 = vadd.f32 %v813, %v871
    %v879 = vxor.u32 %v876, 2147483648
    %v880 = vxor.u32 %v877, 2147483648
    %v881 = vxor.u32 %v878, 2147483648
    %v882 = vmul.f32 %v879, 1.442695
    %v883 = vpow.pop %v882
    %v884 = vmul.f32 %v880, 1.442695
    %v885 = vpow.pop %v884
    %v886 = vmul.f32 %v881, 1.442695
    %v887 = vpow.pop %v886
    %v888 = vadd.f32 %v883, 1.0
    %v889 = vadd.f32 %v885, 1.0
    %v890 = vadd.f32 %v887, 1.0
    %v891 = vrcp.pop %v888
    %v892 = vmul.f32 1.0, %v891
    %v893 = vrcp.pop %v889
    %v894 = vmul.f32 1.0, %v893
    %v895 = vrcp.pop %v890
    %v896 = vmul.f32 1.0, %v895
    %v897 = vtanh.pop %v876
    %v898 = vtanh.pop %v877
    %v899 = vtanh.pop %v878
    %v900 = vmul.f32 %v892, %v780
    %v901 = vmul.f32 %v894, %v781
    %v902 = vmul.f32 %v896, %v782
    %906 = vrot.lane.b32.xlu0 %v897, 64
    %v907 = vpop.permute.xlu0 %906
    %908 = vrot.lane.b32.xlu0 %v898, 64
    %v909 = vpop.permute.xlu0 %908
    %910 = vrot.lane.b32.xlu0 %v899, 64
    %v911 = vpop.permute.xlu0 %910
    %v915 = vmul.f32 %v892, %v907
    %v916 = vmul.f32 %v894, %v909
    %v917 = vmul.f32 %v896, %v911
    %921 = vrot.lane.b32.xlu0 %v915, 32
    %v922 = vpop.permute.xlu0 %921
    %923 = vrot.lane.b32.xlu0 %v916, 32
    %v924 = vpop.permute.xlu0 %923
    %925 = vrot.lane.b32.xlu0 %v917, 32
    %v926 = vpop.permute.xlu0 %925
    %v930 = vadd.f32 %v900, %v922
    %v931 = vadd.f32 %v901, %v924
    %v932 = vadd.f32 %v902, %v926
    %v933 = vtanh.pop %v930
    %v934 = vtanh.pop %v931
    %v935 = vtanh.pop %v932
    %939 = vrot.lane.b32.xlu0 %v933, 64
    %v940 = vpop.permute.xlu0 %939
    %941 = vrot.lane.b32.xlu0 %v934, 64
    %v942 = vpop.permute.xlu0 %941
    %943 = vrot.lane.b32.xlu0 %v935, 64
    %v944 = vpop.permute.xlu0 %943
    %v948 = vmul.f32 %v892, %v940
    %v949 = vmul.f32 %v894, %v942
    %v950 = vmul.f32 %v896, %v944
    %vm951 = vcmp.gt.s32.totalorder %v352, 3
    %vm952 = vcmp.gt.s32.totalorder %v355, 3
    %vm953 = vcmp.gt.s32.totalorder %v358, 3
    %v954 = vsel %vm951, %v948, 0.0
    %v955 = vsel %vm952, %v949, 0.0
    %v956 = vsel %vm953, %v950, 0.0
    %v957 = vmax.f32 %v807, %v954
    %v958 = vmax.f32 %v808, %v955
    %v959 = vmax.f32 %v809, %v956
    %s960 = scalar_lea.vmem [#allocation2], 96
    %v961 = vld [vmem:[%s960] sm:$0xff]
    %v962 = vld [vmem:[%s960 + $0x8] sm:$0xff]
    %v963 = vld [vmem:[%s960 + $0x10] sm:$0xff]
    %v964 = vpack.c.bf16 %v949, %v948
    %v965 = vpack.c.bf16 %v950, %v950
    %968 = vrot.lane.b32.xlu0 %v964, 32
    %v969 = vpop.permute.xlu0 %968
    %970 = vrot.lane.b32.xlu0 %v965, 32
    %v971 = vpop.permute.xlu0 %970
    %v973 = vsel %vm157, %v969, 0
    %v976 = vsel %vm157, %v971, 0
    %978 = vmatprep.subr.bf16.mxu0 0
    %979 = vmatpush1.bf16.msra.mxu0 0
    %980 = vmatprep.subr.bf16.mxu0 0
    %981 = vmatpush1.bf16.msra.mxu0 0
    %982 = vmatprep.subr.bf16.mxu0 0
    %983 = vmatpush1.bf16.msra.mxu0 0
    %984 = vmatprep.subr.bf16.mxu0 0
    %985 = vmatpush1.bf16.msra.mxu0 0
    %986 = vmatprep.subr.bf16.mxu0 0
    %987 = vmatpush1.bf16.msra.mxu0 0
    %988 = vmatprep.subr.bf16.mxu0 0
    %989 = vmatpush1.bf16.msra.mxu0 0
    %990 = vmatprep.subr.bf16.mxu0 0
    %991 = vmatpush1.bf16.msra.mxu0 %v375
    %992 = vmatprep.subr.bf16.mxu0 0
    %993 = vmatpush1.bf16.msra.mxu0 %v374
    %994 = vmatprep.subr.bf16.mxu0 0
    %995 = vmatpush2.bf16.msra.mxu0 0
    %996 = vmatprep.subr.bf16.mxu0 0
    %997 = vmatpush2.bf16.msra.mxu0 0
    %998 = vmatprep.subr.bf16.mxu0 0
    %999 = vmatpush2.bf16.msra.mxu0 0
    %1000 = vmatprep.subr.bf16.mxu0 0
    %1001 = vmatpush2.bf16.msra.mxu0 0
    %1002 = vmatprep.subr.bf16.mxu0 0
    %1003 = vmatpush2.bf16.msra.mxu0 0
    %1004 = vmatprep.subr.bf16.mxu0 0
    %1005 = vmatpush2.bf16.msra.mxu0 0
    %1006 = vmatprep.subr.bf16.mxu0 0
    %1007 = vmatpush2.bf16.msra.mxu0 0
    %1008 = vmatprep.subr.bf16.mxu0 0
    %1009 = vmatpush2.bf16.msra.mxu0 0
    %1010 = vmatprep.mubr.bf16.mxu0 0
    %1011 = vmatmul.mubr.bf16.gmra.mxu0 %v973
    %v1012 = vpop.f32.mrf.mxu0
    %v1013 = vadd.f32 0.0, %v1012
    %v1014 = vpop.f32.mrf.mxu0
    %v1015 = vpop.f32.mrf.mxu0
    %v1016 = vadd.f32 0.0, %v1015
    %v1017 = vpop.f32.mrf.mxu0
    %1018 = vmatprep.mubr.bf16.mxu0 0
    %1019 = vmatmul.mubr.bf16.gmra.mxu0 %v976
    %v1020 = vpop.f32.mrf.mxu0
    %v1021 = vadd.f32 0.0, %v1020
    %v1022 = vpop.f32.mrf.mxu0
    %v1023 = vpop.f32.mrf.mxu0
    %v1024 = vpop.f32.mrf.mxu0
    %1025 = vdwg.mxu0
    %v1026 = vadd.f32 %v961, %v1013
    %v1027 = vadd.f32 %v962, %v1016
    %v1028 = vadd.f32 %v963, %v1021
    %v1029 = vxor.u32 %v1026, 2147483648
    %v1030 = vxor.u32 %v1027, 2147483648
    %v1031 = vxor.u32 %v1028, 2147483648
    %v1032 = vmul.f32 %v1029, 1.442695
    %v1033 = vpow.pop %v1032
    %v1034 = vmul.f32 %v1030, 1.442695
    %v1035 = vpow.pop %v1034
    %v1036 = vmul.f32 %v1031, 1.442695
    %v1037 = vpow.pop %v1036
    %v1038 = vadd.f32 %v1033, 1.0
    %v1039 = vadd.f32 %v1035, 1.0
    %v1040 = vadd.f32 %v1037, 1.0
    %v1041 = vrcp.pop %v1038
    %v1042 = vmul.f32 1.0, %v1041
    %v1043 = vrcp.pop %v1039
    %v1044 = vmul.f32 1.0, %v1043
    %v1045 = vrcp.pop %v1040
    %v1046 = vmul.f32 1.0, %v1045
    %v1047 = vtanh.pop %v1026
    %v1048 = vtanh.pop %v1027
    %v1049 = vtanh.pop %v1028
    %v1050 = vmul.f32 %v1042, %v930
    %v1051 = vmul.f32 %v1044, %v931
    %v1052 = vmul.f32 %v1046, %v932
    %1056 = vrot.lane.b32.xlu0 %v1047, 64
    %v1057 = vpop.permute.xlu0 %1056
    %1058 = vrot.lane.b32.xlu0 %v1048, 64
    %v1059 = vpop.permute.xlu0 %1058
    %1060 = vrot.lane.b32.xlu0 %v1049, 64
    %v1061 = vpop.permute.xlu0 %1060
    %v1065 = vmul.f32 %v1042, %v1057
    %v1066 = vmul.f32 %v1044, %v1059
    %v1067 = vmul.f32 %v1046, %v1061
    %1071 = vrot.lane.b32.xlu0 %v1065, 32
    %v1072 = vpop.permute.xlu0 %1071
    %1073 = vrot.lane.b32.xlu0 %v1066, 32
    %v1074 = vpop.permute.xlu0 %1073
    %1075 = vrot.lane.b32.xlu0 %v1067, 32
    %v1076 = vpop.permute.xlu0 %1075
    %v1080 = vadd.f32 %v1050, %v1072
    %v1081 = vadd.f32 %v1051, %v1074
    %v1082 = vadd.f32 %v1052, %v1076
    %v1083 = vtanh.pop %v1080
    %v1084 = vtanh.pop %v1081
    %v1085 = vtanh.pop %v1082
    %1089 = vrot.lane.b32.xlu0 %v1083, 64
    %v1090 = vpop.permute.xlu0 %1089
    %1091 = vrot.lane.b32.xlu0 %v1084, 64
    %v1092 = vpop.permute.xlu0 %1091
    %1093 = vrot.lane.b32.xlu0 %v1085, 64
    %v1094 = vpop.permute.xlu0 %1093
    %v1098 = vmul.f32 %v1042, %v1090
    %v1099 = vmul.f32 %v1044, %v1092
    %v1100 = vmul.f32 %v1046, %v1094
    %vm1101 = vcmp.gt.s32.totalorder %v352, 4
    %vm1102 = vcmp.gt.s32.totalorder %v355, 4
    %vm1103 = vcmp.gt.s32.totalorder %v358, 4
    %v1104 = vsel %vm1101, %v1098, 0.0
    %v1105 = vsel %vm1102, %v1099, 0.0
    %v1106 = vsel %vm1103, %v1100, 0.0
    %v1107 = vmax.f32 %v957, %v1104
    %v1108 = vmax.f32 %v958, %v1105
    %v1109 = vmax.f32 %v959, %v1106
    %s1110 = scalar_lea.vmem [#allocation2], 120
    %v1111 = vld [vmem:[%s1110] sm:$0xff]
    %v1112 = vld [vmem:[%s1110 + $0x8] sm:$0xff]
    %v1113 = vld [vmem:[%s1110 + $0x10] sm:$0xff]
    %v1114 = vpack.c.bf16 %v1099, %v1098
    %v1115 = vpack.c.bf16 %v1100, %v1100
    %1118 = vrot.lane.b32.xlu0 %v1114, 32
    %v1119 = vpop.permute.xlu0 %1118
    %1120 = vrot.lane.b32.xlu0 %v1115, 32
    %v1121 = vpop.permute.xlu0 %1120
    %v1123 = vsel %vm157, %v1119, 0
    %v1126 = vsel %vm157, %v1121, 0
    %1128 = vmatprep.subr.bf16.mxu0 0
    %1129 = vmatpush1.bf16.msra.mxu0 0
    %1130 = vmatprep.subr.bf16.mxu0 0
    %1131 = vmatpush1.bf16.msra.mxu0 0
    %1132 = vmatprep.subr.bf16.mxu0 0
    %1133 = vmatpush1.bf16.msra.mxu0 0
    %1134 = vmatprep.subr.bf16.mxu0 0
    %1135 = vmatpush1.bf16.msra.mxu0 0
    %1136 = vmatprep.subr.bf16.mxu0 0
    %1137 = vmatpush1.bf16.msra.mxu0 0
    %1138 = vmatprep.subr.bf16.mxu0 0
    %1139 = vmatpush1.bf16.msra.mxu0 0
    %1140 = vmatprep.subr.bf16.mxu0 0
    %1141 = vmatpush1.bf16.msra.mxu0 %v375
    %1142 = vmatprep.subr.bf16.mxu0 0
    %1143 = vmatpush1.bf16.msra.mxu0 %v374
    %1144 = vmatprep.subr.bf16.mxu0 0
    %1145 = vmatpush2.bf16.msra.mxu0 0
    %1146 = vmatprep.subr.bf16.mxu0 0
    %1147 = vmatpush2.bf16.msra.mxu0 0
    %1148 = vmatprep.subr.bf16.mxu0 0
    %1149 = vmatpush2.bf16.msra.mxu0 0
    %1150 = vmatprep.subr.bf16.mxu0 0
    %1151 = vmatpush2.bf16.msra.mxu0 0
    %1152 = vmatprep.subr.bf16.mxu0 0
    %1153 = vmatpush2.bf16.msra.mxu0 0
    %1154 = vmatprep.subr.bf16.mxu0 0
    %1155 = vmatpush2.bf16.msra.mxu0 0
    %1156 = vmatprep.subr.bf16.mxu0 0
    %1157 = vmatpush2.bf16.msra.mxu0 0
    %1158 = vmatprep.subr.bf16.mxu0 0
    %1159 = vmatpush2.bf16.msra.mxu0 0
    %1160 = vmatprep.mubr.bf16.mxu0 0
    %1161 = vmatmul.mubr.bf16.gmra.mxu0 %v1123
    %v1162 = vpop.f32.mrf.mxu0
    %v1163 = vadd.f32 0.0, %v1162
    %v1164 = vpop.f32.mrf.mxu0
    %v1165 = vpop.f32.mrf.mxu0
    %v1166 = vadd.f32 0.0, %v1165
    %v1167 = vpop.f32.mrf.mxu0
    %1168 = vmatprep.mubr.bf16.mxu0 0
    %1169 = vmatmul.mubr.bf16.gmra.mxu0 %v1126
    %v1170 = vpop.f32.mrf.mxu0
    %v1171 = vadd.f32 0.0, %v1170
    %v1172 = vpop.f32.mrf.mxu0
    %v1173 = vpop.f32.mrf.mxu0
    %v1174 = vpop.f32.mrf.mxu0
    %1175 = vdwg.mxu0
    %v1176 = vadd.f32 %v1111, %v1163
    %v1177 = vadd.f32 %v1112, %v1166
    %v1178 = vadd.f32 %v1113, %v1171
    %v1179 = vxor.u32 %v1176, 2147483648
    %v1180 = vxor.u32 %v1177, 2147483648
    %v1181 = vxor.u32 %v1178, 2147483648
    %v1182 = vmul.f32 %v1179, 1.442695
    %v1183 = vpow.pop %v1182
    %v1184 = vmul.f32 %v1180, 1.442695
    %v1185 = vpow.pop %v1184
    %v1186 = vmul.f32 %v1181, 1.442695
    %v1187 = vpow.pop %v1186
    %v1188 = vadd.f32 %v1183, 1.0
    %v1189 = vadd.f32 %v1185, 1.0
    %v1190 = vadd.f32 %v1187, 1.0
    %v1191 = vrcp.pop %v1188
    %v1192 = vmul.f32 1.0, %v1191
    %v1193 = vrcp.pop %v1189
    %v1194 = vmul.f32 1.0, %v1193
    %v1195 = vrcp.pop %v1190
    %v1196 = vmul.f32 1.0, %v1195
    %v1197 = vtanh.pop %v1176
    %v1198 = vtanh.pop %v1177
    %v1199 = vtanh.pop %v1178
    %v1200 = vmul.f32 %v1192, %v1080
    %v1201 = vmul.f32 %v1194, %v1081
    %v1202 = vmul.f32 %v1196, %v1082
    %1206 = vrot.lane.b32.xlu0 %v1197, 64
    %v1207 = vpop.permute.xlu0 %1206
    %1208 = vrot.lane.b32.xlu0 %v1198, 64
    %v1209 = vpop.permute.xlu0 %1208
    %1210 = vrot.lane.b32.xlu0 %v1199, 64
    %v1211 = vpop.permute.xlu0 %1210
    %v1215 = vmul.f32 %v1192, %v1207
    %v1216 = vmul.f32 %v1194, %v1209
    %v1217 = vmul.f32 %v1196, %v1211
    %1221 = vrot.lane.b32.xlu0 %v1215, 32
    %v1222 = vpop.permute.xlu0 %1221
    %1223 = vrot.lane.b32.xlu0 %v1216, 32
    %v1224 = vpop.permute.xlu0 %1223
    %1225 = vrot.lane.b32.xlu0 %v1217, 32
    %v1226 = vpop.permute.xlu0 %1225
    %v1230 = vadd.f32 %v1200, %v1222
    %v1231 = vadd.f32 %v1201, %v1224
    %v1232 = vadd.f32 %v1202, %v1226
    %v1233 = vtanh.pop %v1230
    %v1234 = vtanh.pop %v1231
    %v1235 = vtanh.pop %v1232
    %1239 = vrot.lane.b32.xlu0 %v1233, 64
    %v1240 = vpop.permute.xlu0 %1239
    %1241 = vrot.lane.b32.xlu0 %v1234, 64
    %v1242 = vpop.permute.xlu0 %1241
    %1243 = vrot.lane.b32.xlu0 %v1235, 64
    %v1244 = vpop.permute.xlu0 %1243
    %v1248 = vmul.f32 %v1192, %v1240
    %v1249 = vmul.f32 %v1194, %v1242
    %v1250 = vmul.f32 %v1196, %v1244
    %vm1251 = vcmp.gt.s32.totalorder %v352, 5
    %vm1252 = vcmp.gt.s32.totalorder %v355, 5
    %vm1253 = vcmp.gt.s32.totalorder %v358, 5
    %v1254 = vsel %vm1251, %v1248, 0.0
    %v1255 = vsel %vm1252, %v1249, 0.0
    %v1256 = vsel %vm1253, %v1250, 0.0
    %v1257 = vmax.f32 %v1107, %v1254
    %v1258 = vmax.f32 %v1108, %v1255
    %v1259 = vmax.f32 %v1109, %v1256
    %s1260 = scalar_lea.vmem [#allocation2], 144
    %v1261 = vld [vmem:[%s1260] sm:$0xff]
    %v1262 = vld [vmem:[%s1260 + $0x8] sm:$0xff]
    %v1263 = vld [vmem:[%s1260 + $0x10] sm:$0xff]
    %v1264 = vpack.c.bf16 %v1249, %v1248
    %v1265 = vpack.c.bf16 %v1250, %v1250
    %1268 = vrot.lane.b32.xlu0 %v1264, 32
    %v1269 = vpop.permute.xlu0 %1268
    %1270 = vrot.lane.b32.xlu0 %v1265, 32
    %v1271 = vpop.permute.xlu0 %1270
    %v1273 = vsel %vm157, %v1269, 0
    %v1276 = vsel %vm157, %v1271, 0
    %1278 = vmatprep.subr.bf16.mxu0 0
    %1279 = vmatpush1.bf16.msra.mxu0 0
    %1280 = vmatprep.subr.bf16.mxu0 0
    %1281 = vmatpush1.bf16.msra.mxu0 0
    %1282 = vmatprep.subr.bf16.mxu0 0
    %1283 = vmatpush1.bf16.msra.mxu0 0
    %1284 = vmatprep.subr.bf16.mxu0 0
    %1285 = vmatpush1.bf16.msra.mxu0 0
    %1286 = vmatprep.subr.bf16.mxu0 0
    %1287 = vmatpush1.bf16.msra.mxu0 0
    %1288 = vmatprep.subr.bf16.mxu0 0
    %1289 = vmatpush1.bf16.msra.mxu0 0
    %1290 = vmatprep.subr.bf16.mxu0 0
    %1291 = vmatpush1.bf16.msra.mxu0 %v375
    %1292 = vmatprep.subr.bf16.mxu0 0
    %1293 = vmatpush1.bf16.msra.mxu0 %v374
    %1294 = vmatprep.subr.bf16.mxu0 0
    %1295 = vmatpush2.bf16.msra.mxu0 0
    %1296 = vmatprep.subr.bf16.mxu0 0
    %1297 = vmatpush2.bf16.msra.mxu0 0
    %1298 = vmatprep.subr.bf16.mxu0 0
    %1299 = vmatpush2.bf16.msra.mxu0 0
    %1300 = vmatprep.subr.bf16.mxu0 0
    %1301 = vmatpush2.bf16.msra.mxu0 0
    %1302 = vmatprep.subr.bf16.mxu0 0
    %1303 = vmatpush2.bf16.msra.mxu0 0
    %1304 = vmatprep.subr.bf16.mxu0 0
    %1305 = vmatpush2.bf16.msra.mxu0 0
    %1306 = vmatprep.subr.bf16.mxu0 0
    %1307 = vmatpush2.bf16.msra.mxu0 0
    %1308 = vmatprep.subr.bf16.mxu0 0
    %1309 = vmatpush2.bf16.msra.mxu0 0
    %1310 = vmatprep.mubr.bf16.mxu0 0
    %1311 = vmatmul.mubr.bf16.gmra.mxu0 %v1273
    %v1312 = vpop.f32.mrf.mxu0
    %v1313 = vadd.f32 0.0, %v1312
    %v1314 = vpop.f32.mrf.mxu0
    %v1315 = vpop.f32.mrf.mxu0
    %v1316 = vadd.f32 0.0, %v1315
    %v1317 = vpop.f32.mrf.mxu0
    %1318 = vmatprep.mubr.bf16.mxu0 0
    %1319 = vmatmul.mubr.bf16.gmra.mxu0 %v1276
    %v1320 = vpop.f32.mrf.mxu0
    %v1321 = vadd.f32 0.0, %v1320
    %v1322 = vpop.f32.mrf.mxu0
    %v1323 = vpop.f32.mrf.mxu0
    %v1324 = vpop.f32.mrf.mxu0
    %1325 = vdwg.mxu0
    %v1326 = vadd.f32 %v1261, %v1313
    %v1327 = vadd.f32 %v1262, %v1316
    %v1328 = vadd.f32 %v1263, %v1321
    %v1329 = vxor.u32 %v1326, 2147483648
    %v1330 = vxor.u32 %v1327, 2147483648
    %v1331 = vxor.u32 %v1328, 2147483648
    %v1332 = vmul.f32 %v1329, 1.442695
    %v1333 = vpow.pop %v1332
    %v1334 = vmul.f32 %v1330, 1.442695
    %v1335 = vpow.pop %v1334
    %v1336 = vmul.f32 %v1331, 1.442695
    %v1337 = vpow.pop %v1336
    %v1338 = vadd.f32 %v1333, 1.0
    %v1339 = vadd.f32 %v1335, 1.0
    %v1340 = vadd.f32 %v1337, 1.0
    %v1341 = vrcp.pop %v1338
    %v1342 = vmul.f32 1.0, %v1341
    %v1343 = vrcp.pop %v1339
    %v1344 = vmul.f32 1.0, %v1343
    %v1345 = vrcp.pop %v1340
    %v1346 = vmul.f32 1.0, %v1345
    %v1347 = vtanh.pop %v1326
    %v1348 = vtanh.pop %v1327
    %v1349 = vtanh.pop %v1328
    %v1350 = vmul.f32 %v1342, %v1230
    %v1351 = vmul.f32 %v1344, %v1231
    %v1352 = vmul.f32 %v1346, %v1232
    %1356 = vrot.lane.b32.xlu0 %v1347, 64
    %v1357 = vpop.permute.xlu0 %1356
    %1358 = vrot.lane.b32.xlu0 %v1348, 64
    %v1359 = vpop.permute.xlu0 %1358
    %1360 = vrot.lane.b32.xlu0 %v1349, 64
    %v1361 = vpop.permute.xlu0 %1360
    %v1365 = vmul.f32 %v1342, %v1357
    %v1366 = vmul.f32 %v1344, %v1359
    %v1367 = vmul.f32 %v1346, %v1361
    %1371 = vrot.lane.b32.xlu0 %v1365, 32
    %v1372 = vpop.permute.xlu0 %1371
    %1373 = vrot.lane.b32.xlu0 %v1366, 32
    %v1374 = vpop.permute.xlu0 %1373
    %1375 = vrot.lane.b32.xlu0 %v1367, 32
    %v1376 = vpop.permute.xlu0 %1375
    %v1380 = vadd.f32 %v1350, %v1372
    %v1381 = vadd.f32 %v1351, %v1374
    %v1382 = vadd.f32 %v1352, %v1376
    %v1383 = vtanh.pop %v1380
    %v1384 = vtanh.pop %v1381
    %v1385 = vtanh.pop %v1382
    %1389 = vrot.lane.b32.xlu0 %v1383, 64
    %v1390 = vpop.permute.xlu0 %1389
    %1391 = vrot.lane.b32.xlu0 %v1384, 64
    %v1392 = vpop.permute.xlu0 %1391
    %1393 = vrot.lane.b32.xlu0 %v1385, 64
    %v1394 = vpop.permute.xlu0 %1393
    %v1398 = vmul.f32 %v1342, %v1390
    %v1399 = vmul.f32 %v1344, %v1392
    %v1400 = vmul.f32 %v1346, %v1394
    %vm1401 = vcmp.gt.s32.totalorder %v352, 6
    %vm1402 = vcmp.gt.s32.totalorder %v355, 6
    %vm1403 = vcmp.gt.s32.totalorder %v358, 6
    %v1404 = vsel %vm1401, %v1398, 0.0
    %v1405 = vsel %vm1402, %v1399, 0.0
    %v1406 = vsel %vm1403, %v1400, 0.0
    %v1407 = vmax.f32 %v1257, %v1404
    %v1408 = vmax.f32 %v1258, %v1405
    %v1409 = vmax.f32 %v1259, %v1406
    %s1410 = scalar_lea.vmem [#allocation2], 168
    %v1411 = vld [vmem:[%s1410] sm:$0xff]
    %v1412 = vld [vmem:[%s1410 + $0x8] sm:$0xff]
    %v1413 = vld [vmem:[%s1410 + $0x10] sm:$0xff]
    %v1414 = vpack.c.bf16 %v1399, %v1398
    %v1415 = vpack.c.bf16 %v1400, %v1400
    %1418 = vrot.lane.b32.xlu0 %v1414, 32
    %v1419 = vpop.permute.xlu0 %1418
    %1420 = vrot.lane.b32.xlu0 %v1415, 32
    %v1421 = vpop.permute.xlu0 %1420
    %v1423 = vsel %vm157, %v1419, 0
    %v1426 = vsel %vm157, %v1421, 0
    %1428 = vmatprep.subr.bf16.mxu0 0
    %1429 = vmatpush1.bf16.msra.mxu0 0
    %1430 = vmatprep.subr.bf16.mxu0 0
    %1431 = vmatpush1.bf16.msra.mxu0 0
    %1432 = vmatprep.subr.bf16.mxu0 0
    %1433 = vmatpush1.bf16.msra.mxu0 0
    %1434 = vmatprep.subr.bf16.mxu0 0
    %1435 = vmatpush1.bf16.msra.mxu0 0
    %1436 = vmatprep.subr.bf16.mxu0 0
    %1437 = vmatpush1.bf16.msra.mxu0 0
    %1438 = vmatprep.subr.bf16.mxu0 0
    %1439 = vmatpush1.bf16.msra.mxu0 0
    %1440 = vmatprep.subr.bf16.mxu0 0
    %1441 = vmatpush1.bf16.msra.mxu0 %v375
    %1442 = vmatprep.subr.bf16.mxu0 0
    %1443 = vmatpush1.bf16.msra.mxu0 %v374
    %1444 = vmatprep.subr.bf16.mxu0 0
    %1445 = vmatpush2.bf16.msra.mxu0 0
    %1446 = vmatprep.subr.bf16.mxu0 0
    %1447 = vmatpush2.bf16.msra.mxu0 0
    %1448 = vmatprep.subr.bf16.mxu0 0
    %1449 = vmatpush2.bf16.msra.mxu0 0
    %1450 = vmatprep.subr.bf16.mxu0 0
    %1451 = vmatpush2.bf16.msra.mxu0 0
    %1452 = vmatprep.subr.bf16.mxu0 0
    %1453 = vmatpush2.bf16.msra.mxu0 0
    %1454 = vmatprep.subr.bf16.mxu0 0
    %1455 = vmatpush2.bf16.msra.mxu0 0
    %1456 = vmatprep.subr.bf16.mxu0 0
    %1457 = vmatpush2.bf16.msra.mxu0 0
    %1458 = vmatprep.subr.bf16.mxu0 0
    %1459 = vmatpush2.bf16.msra.mxu0 0
    %1460 = vmatprep.mubr.bf16.mxu0 0
    %1461 = vmatmul.mubr.bf16.gmra.mxu0 %v1423
    %v1462 = vpop.f32.mrf.mxu0
    %v1463 = vadd.f32 0.0, %v1462
    %v1464 = vpop.f32.mrf.mxu0
    %v1465 = vpop.f32.mrf.mxu0
    %v1466 = vadd.f32 0.0, %v1465
    %v1467 = vpop.f32.mrf.mxu0
    %1468 = vmatprep.mubr.bf16.mxu0 0
    %1469 = vmatmul.mubr.bf16.gmra.mxu0 %v1426
    %v1470 = vpop.f32.mrf.mxu0
    %v1471 = vadd.f32 0.0, %v1470
    %v1472 = vpop.f32.mrf.mxu0
    %v1473 = vpop.f32.mrf.mxu0
    %v1474 = vpop.f32.mrf.mxu0
    %1475 = vdwg.mxu0
    %v1476 = vadd.f32 %v1411, %v1463
    %v1477 = vadd.f32 %v1412, %v1466
    %v1478 = vadd.f32 %v1413, %v1471
    %v1479 = vxor.u32 %v1476, 2147483648
    %v1480 = vxor.u32 %v1477, 2147483648
    %v1481 = vxor.u32 %v1478, 2147483648
    %v1482 = vmul.f32 %v1479, 1.442695
    %v1483 = vpow.pop %v1482
    %v1484 = vmul.f32 %v1480, 1.442695
    %v1485 = vpow.pop %v1484
    %v1486 = vmul.f32 %v1481, 1.442695
    %v1487 = vpow.pop %v1486
    %v1488 = vadd.f32 %v1483, 1.0
    %v1489 = vadd.f32 %v1485, 1.0
    %v1490 = vadd.f32 %v1487, 1.0
    %v1491 = vrcp.pop %v1488
    %v1492 = vmul.f32 1.0, %v1491
    %v1493 = vrcp.pop %v1489
    %v1494 = vmul.f32 1.0, %v1493
    %v1495 = vrcp.pop %v1490
    %v1496 = vmul.f32 1.0, %v1495
    %v1497 = vtanh.pop %v1476
    %v1498 = vtanh.pop %v1477
    %v1499 = vtanh.pop %v1478
    %v1500 = vmul.f32 %v1492, %v1380
    %v1501 = vmul.f32 %v1494, %v1381
    %v1502 = vmul.f32 %v1496, %v1382
    %1506 = vrot.lane.b32.xlu0 %v1497, 64
    %v1507 = vpop.permute.xlu0 %1506
    %1508 = vrot.lane.b32.xlu0 %v1498, 64
    %v1509 = vpop.permute.xlu0 %1508
    %1510 = vrot.lane.b32.xlu0 %v1499, 64
    %v1511 = vpop.permute.xlu0 %1510
    %v1515 = vmul.f32 %v1492, %v1507
    %v1516 = vmul.f32 %v1494, %v1509
    %v1517 = vmul.f32 %v1496, %v1511
    %1521 = vrot.lane.b32.xlu0 %v1515, 32
    %v1522 = vpop.permute.xlu0 %1521
    %1523 = vrot.lane.b32.xlu0 %v1516, 32
    %v1524 = vpop.permute.xlu0 %1523
    %1525 = vrot.lane.b32.xlu0 %v1517, 32
    %v1526 = vpop.permute.xlu0 %1525
    %v1530 = vadd.f32 %v1500, %v1522
    %v1531 = vadd.f32 %v1501, %v1524
    %v1532 = vadd.f32 %v1502, %v1526
    %v1533 = vtanh.pop %v1530
    %v1534 = vtanh.pop %v1531
    %v1535 = vtanh.pop %v1532
    %1539 = vrot.lane.b32.xlu0 %v1533, 64
    %v1540 = vpop.permute.xlu0 %1539
    %1541 = vrot.lane.b32.xlu0 %v1534, 64
    %v1542 = vpop.permute.xlu0 %1541
    %1543 = vrot.lane.b32.xlu0 %v1535, 64
    %v1544 = vpop.permute.xlu0 %1543
    %v1548 = vmul.f32 %v1492, %v1540
    %v1549 = vmul.f32 %v1494, %v1542
    %v1550 = vmul.f32 %v1496, %v1544
    %vm1551 = vcmp.gt.s32.totalorder %v352, 7
    %vm1552 = vcmp.gt.s32.totalorder %v355, 7
    %vm1553 = vcmp.gt.s32.totalorder %v358, 7
    %v1554 = vsel %vm1551, %v1548, 0.0
    %v1555 = vsel %vm1552, %v1549, 0.0
    %v1556 = vsel %vm1553, %v1550, 0.0
    %v1557 = vmax.f32 %v1407, %v1554
    %v1558 = vmax.f32 %v1408, %v1555
    %v1559 = vmax.f32 %v1409, %v1556
    %1563 = vrot.lane.b32.xlu0 %v1557, 32
    %v1564 = vpop.permute.xlu0 %1563
    %1565 = vrot.lane.b32.xlu0 %v1558, 32
    %v1566 = vpop.permute.xlu0 %1565
    %1567 = vrot.lane.b32.xlu0 %v1559, 32
    %v1568 = vpop.permute.xlu0 %1567
    %1572 = vst.msk [vmem:[#allocation8] sm:$0xff] %vm157, %v1564
    %1573 = vst.msk [vmem:[#allocation8 + $0x8] sm:$0xff] %vm157, %v1566
    %1574 = vst.msk [vmem:[#allocation8 + $0x10] sm:$0xff] %vm157, %v1568
    // Predicated region
    $region30: #{_lstm_max_fused.1} parent=1 // pred_check
      _
    $region31: #{_lstm_max_fused.1} parent=1 // pred_check_branch
      %1576 = sbr.rel (0) target = $region33
    $region32: #{_lstm_max_fused.1} parent=1 // pred_region
      %s1578 = ssub.s32 384, 384
      %1579 = vsyncadd [#allocation5], %s1578
      %s1580 = sshll.u32 [#allocation8], 4
      %s1581 = int_to_ptr.vmem [resolvable:$true] %s1580
      %1586 = dma.vmem_to_hbm [thread:$0]  %s1581, 384, %s5, [#allocation5], 128, 128, 8
    $region33: #{_lstm_max_fused.1} parent=1 // pred_fallthru
      _
    // Predicated region
    $region34: #{_lstm_max_fused.1} parent=1 // pred_check
      _
    $region35: #{_lstm_max_fused.1} parent=1 // pred_check_branch
      %1588 = sbr.rel (0) target = $region37
    $region36: #{_lstm_max_fused.1} parent=1 // pred_region
      %1589 = dma.done [#allocation5], 384
    $region37: #{_lstm_max_fused.1} parent=1 // pred_fallthru
      _
    %1590 = vsyncpa [#allocation4], 1
    %1591 = vsyncpa [#allocation7], 1
    %1592 = vsyncpa [#allocation5], 1

</llo_original>
